<compile_context>
chip_gen: v5e
topology: v5e:2x2
jax: 0.10.0
libtpu: 0.0.40
codegen_flags: <defaults>
</compile_context>

<pallas_src>
import functools

import jax
import jax.numpy as jnp
from jax.experimental import pallas as pl
from jax.experimental.pallas import tpu as pltpu


def _layer_norm(x, g, b, eps=1e-5):
    mu = jnp.mean(x, axis=-1, keepdims=True)
    xc = x - mu
    var = jnp.mean(xc * xc, axis=-1, keepdims=True)
    return xc * jax.lax.rsqrt(var + eps) * g + b


def fused_encoder_kernel(*refs, n_heads, head_chunk, mask_mode, exp_bf16):
    """One grid step = (one batch block, one layer)."""
    if mask_mode == "explicit":
        mask_ref, refs = refs[0], refs[1:]
    else:
        mask_ref = None
    (x_ref, wqkv_ref, bqkv_ref, wo_ref, bo_ref,
     ln1g_ref, ln1b_ref, ln2g_ref, ln2b_ref,
     w1_ref, b1_ref, w2_ref, b2_ref,
     o_ref, h_ref, qkvh_ref, ctx_ref) = refs

    Bt, S, D = x_ref.shape
    H = n_heads
    Dh = D // H
    Hc = head_chunk
    layer = pl.program_id(1)

    # Initialize the VMEM-resident activation from the input on the first layer.
    @pl.when(layer == 0)
    def _():
        h_ref[...] = x_ref[...].astype(jnp.float32)

    h2d = h_ref[...].reshape(Bt * S, D)              # (Bt*S, D) float32
    h_bf = h2d.astype(jnp.bfloat16)

    # ---- multi-head self-attention -------------------------------------
    # Packed QKV projection (1/sqrt(Dh) already folded into the Q columns).
    qkv = jnp.dot(h_bf, wqkv_ref[0],
                  preferred_element_type=jnp.float32) + bqkv_ref[0]   # (Bt*S, 3D)

    # Single relayout to head-major: (Bt*S,3D) -> (Bt,S,3H,Dh) -> (3H,Bt,S,Dh).
    qkvh_ref[...] = jnp.transpose(qkv.reshape(Bt, S, 3 * H, Dh), (2, 0, 1, 3))

    if mask_mode == "causal":
        rows = jax.lax.broadcasted_iota(jnp.int32, (S, S), 0)
        cols = jax.lax.broadcasted_iota(jnp.int32, (S, S), 1)
        causal_bool = cols > rows
    else:
        causal_bool = None

    def attn_chunk(hc0):
        q_c = qkvh_ref[pl.ds(hc0, Hc)].reshape(Hc * Bt, S, Dh)
        k_c = qkvh_ref[pl.ds(H + hc0, Hc)].reshape(Hc * Bt, S, Dh)
        v_c = qkvh_ref[pl.ds(2 * H + hc0, Hc)].reshape(Hc * Bt, S, Dh)

        s = jnp.einsum("gqd,gkd->gqk",
                       q_c.astype(jnp.bfloat16), k_c.astype(jnp.bfloat16),
                       preferred_element_type=jnp.float32)            # (Hc*Bt, S, S)
        if mask_mode == "causal":
            s = jnp.where(causal_bool[None], jnp.float32(-1e30), s)   # single select
        elif mask_mode == "explicit":
            s = s + mask_ref[...]                                     # additive f32 mask

        m = jnp.max(s, axis=-1, keepdims=True)
        if exp_bf16:   # v6e/v7x only: bf16 EUP ~2x throughput, halves live p
            p = jnp.exp((s - m).astype(jnp.bfloat16))
            denom = jnp.sum(p.astype(jnp.float32), axis=-1, keepdims=True)
        else:
            p = jnp.exp(s - m)
            denom = jnp.sum(p, axis=-1, keepdims=True)

        ctx_c = jnp.einsum("gqk,gkd->gqd",
                           p.astype(jnp.bfloat16), v_c.astype(jnp.bfloat16),
                           preferred_element_type=jnp.float32)        # (Hc*Bt, S, Dh)
        # Normalize after PV: scales S*Dh elements instead of S*S; EUP reciprocal.
        ctx_c = ctx_c * pl.reciprocal(denom, approx=True)
        ctx_ref[pl.ds(hc0, Hc)] = ctx_c.reshape(Hc, Bt, S, Dh)

    n_chunks = H // Hc
    if n_chunks == 1:
        attn_chunk(0)
    else:
        @pl.loop(0, n_chunks)
        def _(c):
            attn_chunk(c * Hc)

    # Back to token-major and one full-K output projection against original W_o.
    ctx = jnp.transpose(ctx_ref[...], (1, 2, 0, 3)).reshape(Bt * S, D)
    attn = jnp.dot(ctx.astype(jnp.bfloat16), wo_ref[0],
                   preferred_element_type=jnp.float32) + bo_ref[0]    # (Bt*S, D)

    # q2 = h + attn ; h1 = h + dropout1(q2)  (dropout = identity at inference)
    h1 = h2d + (h2d + attn)
    h1 = _layer_norm(h1, ln1g_ref[0], ln1b_ref[0])

    # ---- feed-forward: Linear(D,4D) -> ReLU -> Linear(4D,D) -------------
    # TODO(synk): for d_model >= ~768 on v7x, K-tile the FFN weights with an
    # inner pltpu.emit_pipeline so the (D,4D)+(4D,D) pair is not fully
    # double-buffered in 64 MiB VMEM.
    ff = jnp.dot(h1.astype(jnp.bfloat16), w1_ref[0],
                 preferred_element_type=jnp.float32) + b1_ref[0]
    ff = jnp.maximum(ff, 0.0)
    ff = jnp.dot(ff.astype(jnp.bfloat16), w2_ref[0],
                 preferred_element_type=jnp.float32) + b2_ref[0]

    h2 = h1 + (h1 + ff)
    h2 = _layer_norm(h2, ln2g_ref[0], ln2b_ref[0])
    h2_b = h2.reshape(Bt, S, D)

    # Carry the activation to the next layer; write HBM only once at the end.
    h_ref[...] = h2_b

    @pl.when(layer == pl.num_programs(1) - 1)
    def _():
        o_ref[...] = h2_b.astype(o_ref.dtype)


def prepare_encoder_params(layer_params, n_heads):
    """Stack per-layer params once (hoisted out of the per-call forward path)."""
    def stack(i):
        return jnp.stack([p[i] for p in layer_params], axis=0)

    wqkv = stack(0)                                    # (L, D, 3D)
    bqkv = stack(1)                                    # (L, 1, 3D)
    D = wqkv.shape[1]
    scale = 1.0 / float(D // n_heads) ** 0.5
    # Fold the 1/sqrt(Dh) query scale into the Q columns of W_qkv / b_qkv.
    wqkv = wqkv.at[:, :, :D].multiply(scale).astype(jnp.bfloat16)
    bqkv = bqkv.at[:, :, :D].multiply(scale)
    wo = stack(2).astype(jnp.bfloat16)                 # (L, D, D) -- un-reshaped
    bo = stack(3)                                      # (L, 1, D)
    ln1g, ln1b = stack(4), stack(5)
    ln2g, ln2b = stack(6), stack(7)
    w1 = stack(8).astype(jnp.bfloat16)                 # (L, D, 4D)
    b1 = stack(9)
    w2 = stack(10).astype(jnp.bfloat16)                # (L, 4D, D)
    b2 = stack(11)
    return (wqkv, bqkv, wo, bo, ln1g, ln1b, ln2g, ln2b, w1, b1, w2, b2)


def _eup_supports_bf16():
    try:
        kind = jax.devices()[0].device_kind.lower()
    except Exception:
        return False
    return ("v6" in kind) or ("v7" in kind)


def _choose_blocking(B, S, D, H, in_itemsize, batch_block=None, head_chunk=None,
                     budget=48 * 2 ** 20):
    """Pick (batch block, head chunk, vmem limit) under a ~48MiB working-set budget
    so the kernel also fits v7x's 64 MiB physical VMEM."""
    d_ff = 4 * D

    def est(bt, hc):
        w = 2 * 2 * (3 * D * D + D * D + 2 * D * d_ff)   # bf16 weights, double-buffered
        io = 2 * 2 * bt * S * D * in_itemsize            # x + out blocks, double-buffered
        act = 15 * bt * S * D * 4                        # carry/qkv/ctx scratch + f32 temps
        scores = 2 * hc * bt * S * S * 4                 # scores + probs per head chunk
        return w + io + act + scores

    if batch_block is None:
        cap = max(1, B // 2) if B > 1 else 1             # keep >=2 blocks for v7x dual-TC
        batch_block = 1
        for cand in range(cap, 0, -1):
            if B % cand == 0 and est(cand, 1) <= budget:
                batch_block = cand
                break
    if head_chunk is None:
        head_chunk = 1
        for cand in range(H, 0, -1):
            if H % cand == 0 and est(batch_block, cand) <= budget:
                head_chunk = cand
                break
    vmem_limit = int(min(max(est(batch_block, head_chunk) * 1.3, 32 * 2 ** 20),
                         100 * 2 ** 20))
    return batch_block, head_chunk, vmem_limit


def self_attention_encoder_pallas(x, stacked_params, n_heads, mask=None,
                                  is_causal=False, batch_block=None,
                                  head_chunk=None, softmax_exp_bf16=None):
    """Fused multi-layer self-attention encoder (no final norm, matching the module)."""
    B, S, D = x.shape
    (wqkv, bqkv, wo, bo, ln1g, ln1b, ln2g, ln2b, w1, b1, w2, b2) = stacked_params
    L = wqkv.shape[0]
    H = n_heads
    assert D % H == 0

    if mask is None and is_causal:
        mask_mode = "causal"
    elif mask is not None:
        mask_mode = "explicit"
        # TODO(synk): boolean or per-(B*H) PyTorch attn_mask variants are not handled;
        # only a single additive float (S, S) mask broadcast over batch/heads.
    else:
        mask_mode = "none"

    Bt, Hc, vmem_limit = _choose_blocking(B, S, D, H, x.dtype.itemsize,
                                          batch_block, head_chunk)
    assert B % Bt == 0 and H % Hc == 0
    if softmax_exp_bf16 is None:
        softmax_exp_bf16 = _eup_supports_bf16()   # bf16 EUP exp only on v6e / v7x

    def layer_spec(arr):
        zeros = (0,) * (arr.ndim - 1)
        return pl.BlockSpec((1,) + arr.shape[1:], lambda b, l: (l,) + zeros)

    inputs, in_specs = [], []
    if mask_mode == "explicit":
        inputs.append(mask.astype(jnp.float32))
        in_specs.append(pl.BlockSpec((S, S), lambda b, l: (0, 0)))
    inputs.append(x)
    in_specs.append(pl.BlockSpec((Bt, S, D), lambda b, l: (b, 0, 0)))
    for arr in (wqkv, bqkv, wo, bo, ln1g, ln1b, ln2g, ln2b, w1, b1, w2, b2):
        inputs.append(arr)
        in_specs.append(layer_spec(arr))

    kernel = functools.partial(fused_encoder_kernel, n_heads=H, head_chunk=Hc,
                               mask_mode=mask_mode, exp_bf16=softmax_exp_bf16)

    return pl.pallas_call(
        kernel,
        grid=(B // Bt, L),
        in_specs=in_specs,
        out_specs=pl.BlockSpec((Bt, S, D), lambda b, l: (b, 0, 0)),
        out_shape=jax.ShapeDtypeStruct((B, S, D), x.dtype),
        scratch_shapes=[
            pltpu.VMEM((Bt, S, D), jnp.float32),            # activation carry
            pltpu.VMEM((3 * H, Bt, S, D // H), jnp.float32),  # head-major q/k/v
            pltpu.VMEM((H, Bt, S, D // H), jnp.float32),      # per-head context
        ],
        compiler_params=pltpu.CompilerParams(
            dimension_semantics=("parallel", "arbitrary"),
            vmem_limit_bytes=vmem_limit),
    )(*inputs)


# ---------- pure-JAX f32 reference (same math as the PyTorch module) ----------
def _ref_layer(x, mask, p, n_heads):
    (wqkv, bqkv, wo, bo, g1, beta1, g2, beta2, w1, b1, w2, b2) = p
    B, S, D = x.shape
    Dh = D // n_heads
    qkv = x @ wqkv + bqkv[0]
    q, k, v = qkv[..., :D], qkv[..., D:2 * D], qkv[..., 2 * D:]
    q = q.reshape(B, S, n_heads, Dh).transpose(0, 2, 1, 3) / (Dh ** 0.5)
    k = k.reshape(B, S, n_heads, Dh).transpose(0, 2, 1, 3)
    v = v.reshape(B, S, n_heads, Dh).transpose(0, 2, 1, 3)
    s = jnp.einsum('bhqd,bhkd->bhqk', q, k) + mask
    pattn = jax.nn.softmax(s, axis=-1)
    o = jnp.einsum('bhqk,bhkd->bhqd', pattn, v).transpose(0, 2, 1, 3).reshape(B, S, D)
    attn = o @ wo + bo[0]
    h1 = x + (x + attn)
    h1 = _layer_norm(h1, g1[0], beta1[0])
    ff = jnp.maximum(h1 @ w1 + b1[0], 0.0) @ w2 + b2[0]
    h2 = h1 + (h1 + ff)
    return _layer_norm(h2, g2[0], beta2[0])


def _ref_encoder(x, layer_params, n_heads, mask):
    for p in layer_params:
        x = _ref_layer(x, mask, p, n_heads)
    return x


# ---------- deterministic parameter construction ----------
def make_layer_params(key, d_model):
    ks = jax.random.split(key, 4)
    std = 0.02
    wqkv = std * jax.random.normal(ks[0], (d_model, 3 * d_model), jnp.float32)
    bqkv = jnp.zeros((1, 3 * d_model), jnp.float32)
    wo = std * jax.random.normal(ks[1], (d_model, d_model), jnp.float32)
    bo = jnp.zeros((1, d_model), jnp.float32)
    g1 = jnp.ones((1, d_model), jnp.float32)
    beta1 = jnp.zeros((1, d_model), jnp.float32)
    g2 = jnp.ones((1, d_model), jnp.float32)
    beta2 = jnp.zeros((1, d_model), jnp.float32)
    w1 = std * jax.random.normal(ks[2], (d_model, 4 * d_model), jnp.float32)
    b1 = jnp.zeros((1, 4 * d_model), jnp.float32)
    w2 = std * jax.random.normal(ks[3], (4 * d_model, d_model), jnp.float32)
    b2 = jnp.zeros((1, d_model), jnp.float32)
    return (wqkv, bqkv, wo, bo, g1, beta1, g2, beta2, w1, b1, w2, b2)


if __name__ == "__main__":
    # Small config consistent with the module: num_layers=2, d_model=32, n_heads=4.
    num_layers, d_model, n_heads = 2, 32, 4
    B, S = 4, 8

    root = jax.random.PRNGKey(0)
    kx, *kls = jax.random.split(root, 1 + num_layers)
    x = jax.random.normal(kx, (B, S, d_model), jnp.float32)
    layer_params = [make_layer_params(k, d_model) for k in kls]
    stacked = prepare_encoder_params(layer_params, n_heads)   # hoisted, done once

    # Non-causal, mask=None (module defaults) -- exercises the batch-blocked path.
    out = jax.block_until_ready(self_attention_encoder_pallas(x, stacked, n_heads))
    ref = _ref_encoder(x, layer_params, n_heads, jnp.zeros((S, S), jnp.float32))
    assert out.shape == (B, S, d_model)
    # bf16 MXU operands (+ optional bf16 exp) + approx reciprocal vs f32 reference.
    assert jnp.allclose(out, ref, rtol=2.5e-2, atol=2.5e-2), "mismatch vs reference (non-causal)"

    # Causal path (mask built in-kernel) with the head-chunked attention loop.
    out_c = jax.block_until_ready(
        self_attention_encoder_pallas(x, stacked, n_heads, is_causal=True,
                                      batch_block=1, head_chunk=2))
    causal = jnp.triu(jnp.full((S, S), -jnp.inf, jnp.float32), k=1)
    ref_c = _ref_encoder(x, layer_params, n_heads, causal)
    assert jnp.allclose(out_c, ref_c, rtol=2.5e-2, atol=2.5e-2), "mismatch vs reference (causal)"

    # TODO(synk): training-mode dropout is not implemented (identity at inference).
    print("KERNEL_OK")
</pallas_src>

<mosaic_0001>
module attributes {stable_mosaic.version = 11 : i64} {
  func.func @fused_encoder_kernel(%arg0: i32, %arg1: i32, %arg2: memref<2x8x32xf32, #tpu.memory_space<vmem>>, %arg3: memref<1x32x96xbf16, #tpu.memory_space<vmem>>, %arg4: memref<1x1x96xf32, #tpu.memory_space<vmem>>, %arg5: memref<1x32x32xbf16, #tpu.memory_space<vmem>>, %arg6: memref<1x1x32xf32, #tpu.memory_space<vmem>>, %arg7: memref<1x1x32xf32, #tpu.memory_space<vmem>>, %arg8: memref<1x1x32xf32, #tpu.memory_space<vmem>>, %arg9: memref<1x1x32xf32, #tpu.memory_space<vmem>>, %arg10: memref<1x1x32xf32, #tpu.memory_space<vmem>>, %arg11: memref<1x32x128xbf16, #tpu.memory_space<vmem>>, %arg12: memref<1x1x128xf32, #tpu.memory_space<vmem>>, %arg13: memref<1x128x32xbf16, #tpu.memory_space<vmem>>, %arg14: memref<1x1x32xf32, #tpu.memory_space<vmem>>, %arg15: memref<2x8x32xf32, #tpu.memory_space<vmem>>, %arg16: memref<2x8x32xf32, #tpu.memory_space<vmem>>, %arg17: memref<12x2x8x8xf32, #tpu.memory_space<vmem>>, %arg18: memref<4x2x8x8xf32, #tpu.memory_space<vmem>>) attributes {dimension_semantics = [#tpu.dimension_semantics<parallel>, #tpu.dimension_semantics<arbitrary>], iteration_bounds = array<i64: 2, 2>, scalar_prefetch = 0 : i64, scratch_operands = 3 : i64, tpu.core_type = #tpu.core_type<tc>, window_params = [{transform_indices = @transform_0, window_bounds = array<i64: 2, 8, 32>}, {transform_indices = @transform_1, window_bounds = array<i64: 1, 32, 96>}, {transform_indices = @transform_2, window_bounds = array<i64: 1, 1, 96>}, {transform_indices = @transform_3, window_bounds = array<i64: 1, 32, 32>}, {transform_indices = @transform_4, window_bounds = array<i64: 1, 1, 32>}, {transform_indices = @transform_5, window_bounds = array<i64: 1, 1, 32>}, {transform_indices = @transform_6, window_bounds = array<i64: 1, 1, 32>}, {transform_indices = @transform_7, window_bounds = array<i64: 1, 1, 32>}, {transform_indices = @transform_8, window_bounds = array<i64: 1, 1, 32>}, {transform_indices = @transform_9, window_bounds = array<i64: 1, 32, 128>}, {transform_indices = @transform_10, window_bounds = array<i64: 1, 1, 128>}, {transform_indices = @transform_11, window_bounds = array<i64: 1, 128, 32>}, {transform_indices = @transform_12, window_bounds = array<i64: 1, 1, 32>}, {transform_indices = @transform_13, window_bounds = array<i64: 2, 8, 32>}]} {
    %c0_i32 = arith.constant 0 : i32
    %0 = arith.cmpi eq, %arg1, %c0_i32 : i32
    %1 = arith.extui %0 : i1 to i32
    %c0_i32_0 = arith.constant 0 : i32
    %2 = arith.cmpi ne, %1, %c0_i32_0 : i32
    scf.if %2 {
      %c0_83 = arith.constant 0 : index
      %c0_84 = arith.constant 0 : index
      %c0_85 = arith.constant 0 : index
      %126 = vector.load %arg2[%c0_83, %c0_84, %c0_85] : memref<2x8x32xf32, #tpu.memory_space<vmem>>, vector<2x8x32xf32>
      %c0_86 = arith.constant 0 : index
      %c0_87 = arith.constant 0 : index
      %c0_88 = arith.constant 0 : index
      %127 = vector.load %arg16[%c0_86, %c0_87, %c0_88] : memref<2x8x32xf32, #tpu.memory_space<vmem>>, vector<2x8x32xf32>
      tpu.vector_store %arg16[%c0_86, %c0_87, %c0_88], %126 {strides = array<i32>} : memref<2x8x32xf32, #tpu.memory_space<vmem>>, vector<2x8x32xf32>,
    } else {
    }
    %c0 = arith.constant 0 : index
    %c0_1 = arith.constant 0 : index
    %c0_2 = arith.constant 0 : index
    %3 = vector.load %arg16[%c0, %c0_1, %c0_2] : memref<2x8x32xf32, #tpu.memory_space<vmem>>, vector<2x8x32xf32>
    %4 = vector.shape_cast %3 : vector<2x8x32xf32> to vector<16x32xf32>
    %5 = arith.truncf %4 : vector<16x32xf32> to vector<16x32xbf16>
    %c0_3 = arith.constant 0 : index
    %c0_4 = arith.constant 0 : index
    %c0_5 = arith.constant 0 : index
    %6 = vector.load %arg3[%c0_3, %c0_4, %c0_5] : memref<1x32x96xbf16, #tpu.memory_space<vmem>>, vector<1x32x96xbf16>
    %7 = vector.shape_cast %6 : vector<1x32x96xbf16> to vector<32x96xbf16>
    %cst = arith.constant dense<0.000000e+00> : vector<16x96xf32>
    %8 = tpu.matmul %5, %7, %cst {dimension_numbers = #tpu.dot_dimension_numbers<[1], [0], [0], [1], [0, 0, 1, 1], [], []>} : vector<16x32xbf16>, vector<32x96xbf16>, vector<16x96xf32> -> vector<16x96xf32>
    %c0_6 = arith.constant 0 : index
    %c0_7 = arith.constant 0 : index
    %c0_8 = arith.constant 0 : index
    %9 = vector.load %arg4[%c0_6, %c0_7, %c0_8] : memref<1x1x96xf32, #tpu.memory_space<vmem>>, vector<1x1x96xf32>
    %10 = vector.shape_cast %9 : vector<1x1x96xf32> to vector<1x96xf32>
    %11 = vector.broadcast %10 : vector<1x96xf32> to vector<16x96xf32>
    %12 = arith.addf %8, %11 : vector<16x96xf32>
    %13 = vector.shape_cast %12 : vector<16x96xf32> to vector<2x8x12x8xf32>
    %14 = tpu.transpose %13, [2, 0, 1, 3] : vector<2x8x12x8xf32> -> vector<12x2x8x8xf32>
    %c0_9 = arith.constant 0 : index
    %c0_10 = arith.constant 0 : index
    %c0_11 = arith.constant 0 : index
    %c0_12 = arith.constant 0 : index
    %15 = vector.load %arg17[%c0_9, %c0_10, %c0_11, %c0_12] : memref<12x2x8x8xf32, #tpu.memory_space<vmem>>, vector<12x2x8x8xf32>
    tpu.vector_store %arg17[%c0_9, %c0_10, %c0_11, %c0_12], %14 {strides = array<i32>} : memref<12x2x8x8xf32, #tpu.memory_space<vmem>>, vector<12x2x8x8xf32>,
    %c0_13 = arith.constant 0 : index
    %c0_14 = arith.constant 0 : index
    %c0_15 = arith.constant 0 : index
    %c0_16 = arith.constant 0 : index
    %16 = vector.load %arg17[%c0_13, %c0_14, %c0_15, %c0_16] : memref<12x2x8x8xf32, #tpu.memory_space<vmem>>, vector<4x2x8x8xf32>
    %17 = vector.shape_cast %16 : vector<4x2x8x8xf32> to vector<8x8x8xf32>
    %c4 = arith.constant 4 : index
    %c0_17 = arith.constant 0 : index
    %c0_18 = arith.constant 0 : index
    %c0_19 = arith.constant 0 : index
    %18 = vector.load %arg17[%c4, %c0_17, %c0_18, %c0_19] : memref<12x2x8x8xf32, #tpu.memory_space<vmem>>, vector<4x2x8x8xf32>
    %19 = vector.shape_cast %18 : vector<4x2x8x8xf32> to vector<8x8x8xf32>
    %c8 = arith.constant 8 : index
    %c0_20 = arith.constant 0 : index
    %c0_21 = arith.constant 0 : index
    %c0_22 = arith.constant 0 : index
    %20 = vector.load %arg17[%c8, %c0_20, %c0_21, %c0_22] : memref<12x2x8x8xf32, #tpu.memory_space<vmem>>, vector<4x2x8x8xf32>
    %21 = vector.shape_cast %20 : vector<4x2x8x8xf32> to vector<8x8x8xf32>
    %22 = arith.truncf %17 : vector<8x8x8xf32> to vector<8x8x8xbf16>
    %23 = arith.truncf %19 : vector<8x8x8xf32> to vector<8x8x8xbf16>
    "tpu.trace_start"() <{level = 10 : i32, message = "gqd,gkd->gqk"}> : () -> ()
    %cst_23 = arith.constant dense<0.000000e+00> : vector<8x8x8xf32>
    %24 = tpu.matmul %22, %23, %cst_23 {dimension_numbers = #tpu.dot_dimension_numbers<[2], [2], [1], [1], [0, 0, 0, 1, 1, 1], [0], [0]>} : vector<8x8x8xbf16>, vector<8x8x8xbf16>, vector<8x8x8xf32> -> vector<8x8x8xf32>
    "tpu.trace_stop"() : () -> ()
    %cst_24 = arith.constant dense<0xFF800000> : vector<8x8xf32>
    %25 = vector.multi_reduction <maximumf>, %24, %cst_24 [2] : vector<8x8x8xf32> to vector<8x8xf32>
    %26 = vector.shape_cast %25 : vector<8x8xf32> to vector<8x8x1xf32>
    %27 = vector.broadcast %26 : vector<8x8x1xf32> to vector<8x8x8xf32>
    %28 = arith.subf %24, %27 : vector<8x8x8xf32>
    %29 = math.exp %28 : vector<8x8x8xf32>
    %cst_25 = arith.constant dense<0.000000e+00> : vector<8x8xf32>
    %30 = vector.multi_reduction <add>, %29, %cst_25 [2] : vector<8x8x8xf32> to vector<8x8xf32>
    %31 = vector.shape_cast %30 : vector<8x8xf32> to vector<8x8x1xf32>
    %32 = arith.truncf %29 : vector<8x8x8xf32> to vector<8x8x8xbf16>
    %33 = arith.truncf %21 : vector<8x8x8xf32> to vector<8x8x8xbf16>
    "tpu.trace_start"() <{level = 10 : i32, message = "gqk,gkd->gqd"}> : () -> ()
    %cst_26 = arith.constant dense<0.000000e+00> : vector<8x8x8xf32>
    %34 = tpu.matmul %32, %33, %cst_26 {dimension_numbers = #tpu.dot_dimension_numbers<[2], [1], [1], [2], [0, 0, 0, 1, 1, 2], [0], [0]>} : vector<8x8x8xbf16>, vector<8x8x8xbf16>, vector<8x8x8xf32> -> vector<8x8x8xf32>
    "tpu.trace_stop"() : () -> ()
    %35 = tpu.reciprocal %31 {approx = true} : vector<8x8x1xf32> -> vector<8x8x1xf32>
    %36 = vector.broadcast %35 : vector<8x8x1xf32> to vector<8x8x8xf32>
    %37 = arith.mulf %34, %36 : vector<8x8x8xf32>
    %38 = vector.shape_cast %37 : vector<8x8x8xf32> to vector<4x2x8x8xf32>
    %c0_27 = arith.constant 0 : index
    %c0_28 = arith.constant 0 : index
    %c0_29 = arith.constant 0 : index
    %c0_30 = arith.constant 0 : index
    %39 = vector.load %arg18[%c0_27, %c0_28, %c0_29, %c0_30] : memref<4x2x8x8xf32, #tpu.memory_space<vmem>>, vector<4x2x8x8xf32>
    tpu.vector_store %arg18[%c0_27, %c0_28, %c0_29, %c0_30], %38 {strides = array<i32>} : memref<4x2x8x8xf32, #tpu.memory_space<vmem>>, vector<4x2x8x8xf32>,
    %c0_31 = arith.constant 0 : index
    %c0_32 = arith.constant 0 : index
    %c0_33 = arith.constant 0 : index
    %c0_34 = arith.constant 0 : index
    %40 = vector.load %arg18[%c0_31, %c0_32, %c0_33, %c0_34] : memref<4x2x8x8xf32, #tpu.memory_space<vmem>>, vector<4x2x8x8xf32>
    %41 = tpu.transpose %40, [1, 2, 0, 3] : vector<4x2x8x8xf32> -> vector<2x8x4x8xf32>
    %42 = vector.shape_cast %41 : vector<2x8x4x8xf32> to vector<16x32xf32>
    %43 = arith.truncf %42 : vector<16x32xf32> to vector<16x32xbf16>
    %c0_35 = arith.constant 0 : index
    %c0_36 = arith.constant 0 : index
    %c0_37 = arith.constant 0 : index
    %44 = vector.load %arg5[%c0_35, %c0_36, %c0_37] : memref<1x32x32xbf16, #tpu.memory_space<vmem>>, vector<1x32x32xbf16>
    %45 = vector.shape_cast %44 : vector<1x32x32xbf16> to vector<32x32xbf16>
    %cst_38 = arith.constant dense<0.000000e+00> : vector<16x32xf32>
    %46 = tpu.matmul %43, %45, %cst_38 {dimension_numbers = #tpu.dot_dimension_numbers<[1], [0], [0], [1], [0, 0, 1, 1], [], []>} : vector<16x32xbf16>, vector<32x32xbf16>, vector<16x32xf32> -> vector<16x32xf32>
    %c0_39 = arith.constant 0 : index
    %c0_40 = arith.constant 0 : index
    %c0_41 = arith.constant 0 : index
    %47 = vector.load %arg6[%c0_39, %c0_40, %c0_41] : memref<1x1x32xf32, #tpu.memory_space<vmem>>, vector<1x1x32xf32>
    %48 = vector.shape_cast %47 : vector<1x1x32xf32> to vector<1x32xf32>
    %49 = vector.broadcast %48 : vector<1x32xf32> to vector<16x32xf32>
    %50 = arith.addf %46, %49 : vector<16x32xf32>
    %51 = arith.addf %4, %50 : vector<16x32xf32>
    %52 = arith.addf %4, %51 : vector<16x32xf32>
    %c0_42 = arith.constant 0 : index
    %c0_43 = arith.constant 0 : index
    %c0_44 = arith.constant 0 : index
    %53 = vector.load %arg7[%c0_42, %c0_43, %c0_44] : memref<1x1x32xf32, #tpu.memory_space<vmem>>, vector<1x1x32xf32>
    %54 = vector.shape_cast %53 : vector<1x1x32xf32> to vector<1x32xf32>
    %c0_45 = arith.constant 0 : index
    %c0_46 = arith.constant 0 : index
    %c0_47 = arith.constant 0 : index
    %55 = vector.load %arg8[%c0_45, %c0_46, %c0_47] : memref<1x1x32xf32, #tpu.memory_space<vmem>>, vector<1x1x32xf32>
    %56 = vector.shape_cast %55 : vector<1x1x32xf32> to vector<1x32xf32>
    %cst_48 = arith.constant dense<0.000000e+00> : vector<16xf32>
    %57 = vector.multi_reduction <add>, %52, %cst_48 [1] : vector<16x32xf32> to vector<16xf32>
    %58 = vector.shape_cast %57 : vector<16xf32> to vector<16x1xf32>
    %cst_49 = arith.constant 3.200000e+01 : f32
    %59 = vector.broadcast %cst_49 : f32 to vector<16x1xf32>
    %60 = arith.divf %58, %59 : vector<16x1xf32>
    %61 = vector.broadcast %60 : vector<16x1xf32> to vector<16x32xf32>
    %62 = arith.subf %52, %61 : vector<16x32xf32>
    %63 = arith.mulf %62, %62 : vector<16x32xf32>
    %cst_50 = arith.constant dense<0.000000e+00> : vector<16xf32>
    %64 = vector.multi_reduction <add>, %63, %cst_50 [1] : vector<16x32xf32> to vector<16xf32>
    %65 = vector.shape_cast %64 : vector<16xf32> to vector<16x1xf32>
    %cst_51 = arith.constant 3.200000e+01 : f32
    %66 = vector.broadcast %cst_51 : f32 to vector<16x1xf32>
    %67 = arith.divf %65, %66 : vector<16x1xf32>
    %cst_52 = arith.constant 9.99999974E-6 : f32
    %68 = vector.broadcast %cst_52 : f32 to vector<16x1xf32>
    %69 = arith.addf %67, %68 : vector<16x1xf32>
    %70 = math.rsqrt %69 : vector<16x1xf32>
    %71 = vector.broadcast %70 : vector<16x1xf32> to vector<16x32xf32>
    %72 = arith.mulf %62, %71 : vector<16x32xf32>
    %73 = vector.broadcast %54 : vector<1x32xf32> to vector<16x32xf32>
    %74 = arith.mulf %72, %73 : vector<16x32xf32>
    %75 = vector.broadcast %56 : vector<1x32xf32> to vector<16x32xf32>
    %76 = arith.addf %74, %75 : vector<16x32xf32>
    %77 = arith.truncf %76 : vector<16x32xf32> to vector<16x32xbf16>
    %c0_53 = arith.constant 0 : index
    %c0_54 = arith.constant 0 : index
    %c0_55 = arith.constant 0 : index
    %78 = vector.load %arg11[%c0_53, %c0_54, %c0_55] : memref<1x32x128xbf16, #tpu.memory_space<vmem>>, vector<1x32x128xbf16>
    %79 = vector.shape_cast %78 : vector<1x32x128xbf16> to vector<32x128xbf16>
    %cst_56 = arith.constant dense<0.000000e+00> : vector<16x128xf32>
    %80 = tpu.matmul %77, %79, %cst_56 {dimension_numbers = #tpu.dot_dimension_numbers<[1], [0], [0], [1], [0, 0, 1, 1], [], []>} : vector<16x32xbf16>, vector<32x128xbf16>, vector<16x128xf32> -> vector<16x128xf32>
    %c0_57 = arith.constant 0 : index
    %c0_58 = arith.constant 0 : index
    %c0_59 = arith.constant 0 : index
    %81 = vector.load %arg12[%c0_57, %c0_58, %c0_59] : memref<1x1x128xf32, #tpu.memory_space<vmem>>, vector<1x1x128xf32>
    %82 = vector.shape_cast %81 : vector<1x1x128xf32> to vector<1x128xf32>
    %83 = vector.broadcast %82 : vector<1x128xf32> to vector<16x128xf32>
    %84 = arith.addf %80, %83 : vector<16x128xf32>
    %cst_60 = arith.constant 0.000000e+00 : f32
    %85 = vector.broadcast %cst_60 : f32 to vector<16x128xf32>
    %86 = arith.maximumf %84, %85 : vector<16x128xf32>
    %87 = arith.truncf %86 : vector<16x128xf32> to vector<16x128xbf16>
    %c0_61 = arith.constant 0 : index
    %c0_62 = arith.constant 0 : index
    %c0_63 = arith.constant 0 : index
    %88 = vector.load %arg13[%c0_61, %c0_62, %c0_63] : memref<1x128x32xbf16, #tpu.memory_space<vmem>>, vector<1x128x32xbf16>
    %89 = vector.shape_cast %88 : vector<1x128x32xbf16> to vector<128x32xbf16>
    %cst_64 = arith.constant dense<0.000000e+00> : vector<16x32xf32>
    %90 = tpu.matmul %87, %89, %cst_64 {dimension_numbers = #tpu.dot_dimension_numbers<[1], [0], [0], [1], [0, 0, 1, 1], [], []>} : vector<16x128xbf16>, vector<128x32xbf16>, vector<16x32xf32> -> vector<16x32xf32>
    %c0_65 = arith.constant 0 : index
    %c0_66 = arith.constant 0 : index
    %c0_67 = arith.constant 0 : index
    %91 = vector.load %arg14[%c0_65, %c0_66, %c0_67] : memref<1x1x32xf32, #tpu.memory_space<vmem>>, vector<1x1x32xf32>
    %92 = vector.shape_cast %91 : vector<1x1x32xf32> to vector<1x32xf32>
    %93 = vector.broadcast %92 : vector<1x32xf32> to vector<16x32xf32>
    %94 = arith.addf %90, %93 : vector<16x32xf32>
    %95 = arith.addf %76, %94 : vector<16x32xf32>
    %96 = arith.addf %76, %95 : vector<16x32xf32>
    %c0_68 = arith.constant 0 : index
    %c0_69 = arith.constant 0 : index
    %c0_70 = arith.constant 0 : index
    %97 = vector.load %arg9[%c0_68, %c0_69, %c0_70] : memref<1x1x32xf32, #tpu.memory_space<vmem>>, vector<1x1x32xf32>
    %98 = vector.shape_cast %97 : vector<1x1x32xf32> to vector<1x32xf32>
    %c0_71 = arith.constant 0 : index
    %c0_72 = arith.constant 0 : index
    %c0_73 = arith.constant 0 : index
    %99 = vector.load %arg10[%c0_71, %c0_72, %c0_73] : memref<1x1x32xf32, #tpu.memory_space<vmem>>, vector<1x1x32xf32>
    %100 = vector.shape_cast %99 : vector<1x1x32xf32> to vector<1x32xf32>
    %cst_74 = arith.constant dense<0.000000e+00> : vector<16xf32>
    %101 = vector.multi_reduction <add>, %96, %cst_74 [1] : vector<16x32xf32> to vector<16xf32>
    %102 = vector.shape_cast %101 : vector<16xf32> to vector<16x1xf32>
    %cst_75 = arith.constant 3.200000e+01 : f32
    %103 = vector.broadcast %cst_75 : f32 to vector<16x1xf32>
    %104 = arith.divf %102, %103 : vector<16x1xf32>
    %105 = vector.broadcast %104 : vector<16x1xf32> to vector<16x32xf32>
    %106 = arith.subf %96, %105 : vector<16x32xf32>
    %107 = arith.mulf %106, %106 : vector<16x32xf32>
    %cst_76 = arith.constant dense<0.000000e+00> : vector<16xf32>
    %108 = vector.multi_reduction <add>, %107, %cst_76 [1] : vector<16x32xf32> to vector<16xf32>
    %109 = vector.shape_cast %108 : vector<16xf32> to vector<16x1xf32>
    %cst_77 = arith.constant 3.200000e+01 : f32
    %110 = vector.broadcast %cst_77 : f32 to vector<16x1xf32>
    %111 = arith.divf %109, %110 : vector<16x1xf32>
    %cst_78 = arith.constant 9.99999974E-6 : f32
    %112 = vector.broadcast %cst_78 : f32 to vector<16x1xf32>
    %113 = arith.addf %111, %112 : vector<16x1xf32>
    %114 = math.rsqrt %113 : vector<16x1xf32>
    %115 = vector.broadcast %114 : vector<16x1xf32> to vector<16x32xf32>
    %116 = arith.mulf %106, %115 : vector<16x32xf32>
    %117 = vector.broadcast %98 : vector<1x32xf32> to vector<16x32xf32>
    %118 = arith.mulf %116, %117 : vector<16x32xf32>
    %119 = vector.broadcast %100 : vector<1x32xf32> to vector<16x32xf32>
    %120 = arith.addf %118, %119 : vector<16x32xf32>
    %121 = vector.shape_cast %120 : vector<16x32xf32> to vector<2x8x32xf32>
    %c0_79 = arith.constant 0 : index
    %c0_80 = arith.constant 0 : index
    %c0_81 = arith.constant 0 : index
    %122 = vector.load %arg16[%c0_79, %c0_80, %c0_81] : memref<2x8x32xf32, #tpu.memory_space<vmem>>, vector<2x8x32xf32>
    tpu.vector_store %arg16[%c0_79, %c0_80, %c0_81], %121 {strides = array<i32>} : memref<2x8x32xf32, #tpu.memory_space<vmem>>, vector<2x8x32xf32>,
    %c1_i32 = arith.constant 1 : i32
    %123 = arith.cmpi eq, %arg1, %c1_i32 : i32
    %124 = arith.extui %123 : i1 to i32
    %c0_i32_82 = arith.constant 0 : i32
    %125 = arith.cmpi ne, %124, %c0_i32_82 : i32
    scf.if %125 {
      %c0_83 = arith.constant 0 : index
      %c0_84 = arith.constant 0 : index
      %c0_85 = arith.constant 0 : index
      %126 = vector.load %arg15[%c0_83, %c0_84, %c0_85] : memref<2x8x32xf32, #tpu.memory_space<vmem>>, vector<2x8x32xf32>
      tpu.vector_store %arg15[%c0_83, %c0_84, %c0_85], %121 {strides = array<i32>} : memref<2x8x32xf32, #tpu.memory_space<vmem>>, vector<2x8x32xf32>,
    } else {
    }
    return
  }
  func.func @transform_0(%arg0: i32, %arg1: i32) -> (i32, i32, i32) {
    %c0_i32 = arith.constant 0 : i32
    %c0_i32_0 = arith.constant 0 : i32
    %c0_i32_1 = arith.constant 0 : i32
    return %arg0, %c0_i32, %c0_i32_0 : i32, i32, i32
  }
  func.func @transform_1(%arg0: i32, %arg1: i32) -> (i32, i32, i32) {
    %c0_i32 = arith.constant 0 : i32
    %c0_i32_0 = arith.constant 0 : i32
    %c0_i32_1 = arith.constant 0 : i32
    return %arg1, %c0_i32, %c0_i32_0 : i32, i32, i32
  }
  func.func @transform_2(%arg0: i32, %arg1: i32) -> (i32, i32, i32) {
    %c0_i32 = arith.constant 0 : i32
    %c0_i32_0 = arith.constant 0 : i32
    %c0_i32_1 = arith.constant 0 : i32
    return %arg1, %c0_i32, %c0_i32_0 : i32, i32, i32
  }
  func.func @transform_3(%arg0: i32, %arg1: i32) -> (i32, i32, i32) {
    %c0_i32 = arith.constant 0 : i32
    %c0_i32_0 = arith.constant 0 : i32
    %c0_i32_1 = arith.constant 0 : i32
    return %arg1, %c0_i32, %c0_i32_0 : i32, i32, i32
  }
  func.func @transform_4(%arg0: i32, %arg1: i32) -> (i32, i32, i32) {
    %c0_i32 = arith.constant 0 : i32
    %c0_i32_0 = arith.constant 0 : i32
    %c0_i32_1 = arith.constant 0 : i32
    return %arg1, %c0_i32, %c0_i32_0 : i32, i32, i32
  }
  func.func @transform_5(%arg0: i32, %arg1: i32) -> (i32, i32, i32) {
    %c0_i32 = arith.constant 0 : i32
    %c0_i32_0 = arith.constant 0 : i32
    %c0_i32_1 = arith.constant 0 : i32
    return %arg1, %c0_i32, %c0_i32_0 : i32, i32, i32
  }
  func.func @transform_6(%arg0: i32, %arg1: i32) -> (i32, i32, i32) {
    %c0_i32 = arith.constant 0 : i32
    %c0_i32_0 = arith.constant 0 : i32
    %c0_i32_1 = arith.constant 0 : i32
    return %arg1, %c0_i32, %c0_i32_0 : i32, i32, i32
  }
  func.func @transform_7(%arg0: i32, %arg1: i32) -> (i32, i32, i32) {
    %c0_i32 = arith.constant 0 : i32
    %c0_i32_0 = arith.constant 0 : i32
    %c0_i32_1 = arith.constant 0 : i32
    return %arg1, %c0_i32, %c0_i32_0 : i32, i32, i32
  }
  func.func @transform_8(%arg0: i32, %arg1: i32) -> (i32, i32, i32) {
    %c0_i32 = arith.constant 0 : i32
    %c0_i32_0 = arith.constant 0 : i32
    %c0_i32_1 = arith.constant 0 : i32
    return %arg1, %c0_i32, %c0_i32_0 : i32, i32, i32
  }
  func.func @transform_9(%arg0: i32, %arg1: i32) -> (i32, i32, i32) {
    %c0_i32 = arith.constant 0 : i32
    %c0_i32_0 = arith.constant 0 : i32
    %c0_i32_1 = arith.constant 0 : i32
    return %arg1, %c0_i32, %c0_i32_0 : i32, i32, i32
  }
  func.func @transform_10(%arg0: i32, %arg1: i32) -> (i32, i32, i32) {
    %c0_i32 = arith.constant 0 : i32
    %c0_i32_0 = arith.constant 0 : i32
    %c0_i32_1 = arith.constant 0 : i32
    return %arg1, %c0_i32, %c0_i32_0 : i32, i32, i32
  }
  func.func @transform_11(%arg0: i32, %arg1: i32) -> (i32, i32, i32) {
    %c0_i32 = arith.constant 0 : i32
    %c0_i32_0 = arith.constant 0 : i32
    %c0_i32_1 = arith.constant 0 : i32
    return %arg1, %c0_i32, %c0_i32_0 : i32, i32, i32
  }
  func.func @transform_12(%arg0: i32, %arg1: i32) -> (i32, i32, i32) {
    %c0_i32 = arith.constant 0 : i32
    %c0_i32_0 = arith.constant 0 : i32
    %c0_i32_1 = arith.constant 0 : i32
    return %arg1, %c0_i32, %c0_i32_0 : i32, i32, i32
  }
  func.func @transform_13(%arg0: i32, %arg1: i32) -> (i32, i32, i32) {
    %c0_i32 = arith.constant 0 : i32
    %c0_i32_0 = arith.constant 0 : i32
    %c0_i32_1 = arith.constant 0 : i32
    return %arg0, %c0_i32, %c0_i32_0 : i32, i32, i32
  }
}

</mosaic_0001>

<llo_original>
// kernel: tpu_custom_call.1
$region0: #{tpu_custom_call.1}
  #allocation0 [shape = 'u32[]', space=smem, size = 0x4, offset = 0x4, fixed_abs, tag = 'smem constant byte address 0x4 - core index']
  #allocation1 [shape = 'u32[72,128]{1,0:T(1,128)}', space=vmem, size = 0x9000, scoped, tag = 'internal scratch']
  #allocation2 [shape = 'f32[2,8,32]{2,1,0:T(8,128)}', space=vmem, size = 0x2000, scoped, tag = 'scratch operand']
  #allocation3 [shape = 'f32[12,2,8,8]{3,2,1,0:T(8,128)}', space=vmem, size = 0x18000, scoped, tag = 'scratch operand']
  #allocation4 [shape = 'f32[4,2,8,8]{3,2,1,0:T(8,128)}', space=vmem, size = 0x8000, scoped, tag = 'scratch operand']
  %s0 = inlined_call_operand.vmem [shape: f32[4,8,32], index: 0, kind: input, shape index: {}]
  %s1 = inlined_call_operand.vmem [shape: bf16[2,32,96], index: 1, kind: input, shape index: {}]
  %s2 = inlined_call_operand.vmem [shape: f32[2,1,96], index: 2, kind: input, shape index: {}]
  %s3 = inlined_call_operand.vmem [shape: bf16[2,32,32], index: 3, kind: input, shape index: {}]
  %s4 = inlined_call_operand.vmem [shape: f32[2,1,32], index: 4, kind: input, shape index: {}]
  %s5 = inlined_call_operand.vmem [shape: f32[2,1,32], index: 5, kind: input, shape index: {}]
  %s6 = inlined_call_operand.vmem [shape: f32[2,1,32], index: 6, kind: input, shape index: {}]
  %s7 = inlined_call_operand.vmem [shape: f32[2,1,32], index: 7, kind: input, shape index: {}]
  %s8 = inlined_call_operand.vmem [shape: f32[2,1,32], index: 8, kind: input, shape index: {}]
  %s9 = inlined_call_operand.vmem [shape: bf16[2,32,128], index: 9, kind: input, shape index: {}]
  %s10 = inlined_call_operand.vmem [shape: f32[2,1,128], index: 10, kind: input, shape index: {}]
  %s11 = inlined_call_operand.vmem [shape: bf16[2,128,32], index: 11, kind: input, shape index: {}]
  %s12 = inlined_call_operand.vmem [shape: f32[2,1,32], index: 12, kind: input, shape index: {}]
  %s13 = inlined_call_operand.hbm [shape: f32[4,8,32], index: 13, kind: output, shape index: {}]
  %s14 = sld [smem:[#allocation0]]
  $region93: #{tpu_custom_call.1} parent=0
    _
  %s16 = ssub.s32 1, %s14
  %s17 = scalar_select 0, %s16, %s14
  $region1: #{tpu_custom_call.1} parent=0
    #allocation5 [shape = 'u8[16384]{0}', space=vmem, size = 0x4000, scoped, tag = 'output window, operand 0']
    #allocation6 [shape = 's32[2]{0}', space=sflag, size = 0x8, scoped, tag = 'scoped memory for tpu_custom_call.1']
    %18 = vsyncpa [#allocation6], 0
    %s19 = scalar_lea.sflag [#allocation6], 1
    %20 = vsyncpa %s19, 0
    loop: start=0, step=1, limit=6
    $region2: #{tpu_custom_call.1} parent=1 // loop_pre_header
      _
    $region3: #{tpu_custom_call.1} parent=1 // loop_header
      %s22 = sphi 0, %s26
      %p23 = scmp.ge.s32.totalorder %s22, 6
      %s29 = sphi 0, %s41
      %s30 = sphi 0, %s37
      %s31 = sphi 0, %s29
      %s32 = sphi 0, %s30
      %s33 = sphi 0, %s31
      %s34 = sphi 0, %s32
      %s44 = sphi 0, %s46
      %s47 = sphi 0, %s44
      %s48 = sphi 0, %s47
      %s64 = sphi 0, %s48
      %s70 = sphi 0, %s72
      %s73 = sphi 0, %s70
      %s74 = sphi 0, %s73
      %s90 = sphi 0, %s74
      %s96 = sphi 0, %s98
      %s99 = sphi 0, %s96
      %s100 = sphi 0, %s99
      %s116 = sphi 0, %s100
      %s122 = sphi 0, %s124
      %s125 = sphi 0, %s122
      %s126 = sphi 0, %s125
      %s142 = sphi 0, %s126
      %s148 = sphi 0, %s150
      %s151 = sphi 0, %s148
      %s152 = sphi 0, %s151
      %s168 = sphi 0, %s152
      %s174 = sphi 0, %s176
      %s177 = sphi 0, %s174
      %s178 = sphi 0, %s177
      %s194 = sphi 0, %s178
      %s200 = sphi 0, %s202
      %s203 = sphi 0, %s200
      %s204 = sphi 0, %s203
      %s220 = sphi 0, %s204
      %s226 = sphi 0, %s228
      %s229 = sphi 0, %s226
      %s230 = sphi 0, %s229
      %s246 = sphi 0, %s230
      %s252 = sphi 0, %s254
      %s255 = sphi 0, %s252
      %s256 = sphi 0, %s255
      %s272 = sphi 0, %s256
      %s278 = sphi 0, %s280
      %s281 = sphi 0, %s278
      %s282 = sphi 0, %s281
      %s298 = sphi 0, %s282
      %s304 = sphi 0, %s306
      %s307 = sphi 0, %s304
      %s308 = sphi 0, %s307
      %s324 = sphi 0, %s308
      %s330 = sphi 0, %s332
      %s333 = sphi 0, %s330
      %s334 = sphi 0, %s333
      %s350 = sphi 0, %s334
      %s356 = sphi 0, %s358
      %s359 = sphi 0, %s356
      %s360 = sphi 0, %s359
      %s376 = sphi 0, %s360
      %s382 = sphi 0, %s384
      %s385 = sphi 0, %s382
      %s386 = sphi 0, %s385
      %s402 = sphi 0, %s386
    $region4: #{tpu_custom_call.1} parent=1 // loop_header_branch
      %25 = sbr.rel (%p23) target = $region8
    $region5: #{tpu_custom_call.1} parent=1 // loop_body
      %s27 = ssub.s32 %s22, 1
      %s28 = ssub.s32 %s22, 2
      %s35 = sadd.s32 1, %s30
      %p36 = scmp.ge.s32.totalorder %s35, 2
      %s37 = scalar_select %p36, 0, %s35
      %s38 = sadd.s32 1, %s29
      %s39 = scalar_select %p36, %s38, %s29
      %p40 = scmp.ge.s32.totalorder %s39, 2
      %s41 = scalar_select %p40, 0, %s39
      %s42 = ssub.s32 %s29, %s41
      %p43 = scmp.eq.s32.totalorder %s42, 0
      %s45 = sadd.s32 %s44, 1
      %s46 = scalar_select %p43, %s44, %s45
      %p49 = pneg %p43
      %p50 = scmp.eq.s32.totalorder %s22, 3
      %p51 = por %p49, %p50
      %p52 = scmp.ne.s32.totalorder %s44, %s47
      %p53 = scmp.eq.s32.totalorder %s22, 0
      %p54 = por %p52, %p53
      %p55 = scmp.ne.s32.totalorder %s44, %s47
      %p56 = scmp.eq.s32.totalorder %s27, 3
      %p57 = por %p55, %p56
      %p58 = scmp.ne.s32.totalorder %s47, %s48
      %p59 = scmp.eq.s32.totalorder %s27, 0
      %p60 = por %p58, %p59
      %p61 = scmp.ne.s32.totalorder %s47, %s48
      %p62 = scmp.eq.s32.totalorder %s28, 3
      %p63 = por %p61, %p62
      %p65 = scmp.ne.s32.totalorder %s48, %s64
      %p66 = scmp.eq.s32.totalorder %s28, 0
      %p67 = por %p65, %p66
      %s68 = ssub.s32 %s30, %s37
      %p69 = scmp.eq.s32.totalorder %s68, 0
      %s71 = sadd.s32 %s70, 1
      %s72 = scalar_select %p69, %s70, %s71
      %p75 = pneg %p69
      %p76 = scmp.eq.s32.totalorder %s22, 3
      %p77 = por %p75, %p76
      %p78 = scmp.ne.s32.totalorder %s70, %s73
      %p79 = scmp.eq.s32.totalorder %s22, 0
      %p80 = por %p78, %p79
      %p81 = scmp.ne.s32.totalorder %s70, %s73
      %p82 = scmp.eq.s32.totalorder %s27, 3
      %p83 = por %p81, %p82
      %p84 = scmp.ne.s32.totalorder %s73, %s74
      %p85 = scmp.eq.s32.totalorder %s27, 0
      %p86 = por %p84, %p85
      %p87 = scmp.ne.s32.totalorder %s73, %s74
      %p88 = scmp.eq.s32.totalorder %s28, 3
      %p89 = por %p87, %p88
      %p91 = scmp.ne.s32.totalorder %s74, %s90
      %p92 = scmp.eq.s32.totalorder %s28, 0
      %p93 = por %p91, %p92
      %s94 = ssub.s32 %s30, %s37
      %p95 = scmp.eq.s32.totalorder %s94, 0
      %s97 = sadd.s32 %s96, 1
      %s98 = scalar_select %p95, %s96, %s97
      %p101 = pneg %p95
      %p102 = scmp.eq.s32.totalorder %s22, 3
      %p103 = por %p101, %p102
      %p104 = scmp.ne.s32.totalorder %s96, %s99
      %p105 = scmp.eq.s32.totalorder %s22, 0
      %p106 = por %p104, %p105
      %p107 = scmp.ne.s32.totalorder %s96, %s99
      %p108 = scmp.eq.s32.totalorder %s27, 3
      %p109 = por %p107, %p108
      %p110 = scmp.ne.s32.totalorder %s99, %s100
      %p111 = scmp.eq.s32.totalorder %s27, 0
      %p112 = por %p110, %p111
      %p113 = scmp.ne.s32.totalorder %s99, %s100
      %p114 = scmp.eq.s32.totalorder %s28, 3
      %p115 = por %p113, %p114
      %p117 = scmp.ne.s32.totalorder %s100, %s116
      %p118 = scmp.eq.s32.totalorder %s28, 0
      %p119 = por %p117, %p118
      %s120 = ssub.s32 %s30, %s37
      %p121 = scmp.eq.s32.totalorder %s120, 0
      %s123 = sadd.s32 %s122, 1
      %s124 = scalar_select %p121, %s122, %s123
      %p127 = pneg %p121
      %p128 = scmp.eq.s32.totalorder %s22, 3
      %p129 = por %p127, %p128
      %p130 = scmp.ne.s32.totalorder %s122, %s125
      %p131 = scmp.eq.s32.totalorder %s22, 0
      %p132 = por %p130, %p131
      %p133 = scmp.ne.s32.totalorder %s122, %s125
      %p134 = scmp.eq.s32.totalorder %s27, 3
      %p135 = por %p133, %p134
      %p136 = scmp.ne.s32.totalorder %s125, %s126
      %p137 = scmp.eq.s32.totalorder %s27, 0
      %p138 = por %p136, %p137
      %p139 = scmp.ne.s32.totalorder %s125, %s126
      %p140 = scmp.eq.s32.totalorder %s28, 3
      %p141 = por %p139, %p140
      %p143 = scmp.ne.s32.totalorder %s126, %s142
      %p144 = scmp.eq.s32.totalorder %s28, 0
      %p145 = por %p143, %p144
      %s146 = ssub.s32 %s30, %s37
      %p147 = scmp.eq.s32.totalorder %s146, 0
      %s149 = sadd.s32 %s148, 1
      %s150 = scalar_select %p147, %s148, %s149
      %p153 = pneg %p147
      %p154 = scmp.eq.s32.totalorder %s22, 3
      %p155 = por %p153, %p154
      %p156 = scmp.ne.s32.totalorder %s148, %s151
      %p157 = scmp.eq.s32.totalorder %s22, 0
      %p158 = por %p156, %p157
      %p159 = scmp.ne.s32.totalorder %s148, %s151
      %p160 = scmp.eq.s32.totalorder %s27, 3
      %p161 = por %p159, %p160
      %p162 = scmp.ne.s32.totalorder %s151, %s152
      %p163 = scmp.eq.s32.totalorder %s27, 0
      %p164 = por %p162, %p163
      %p165 = scmp.ne.s32.totalorder %s151, %s152
      %p166 = scmp.eq.s32.totalorder %s28, 3
      %p167 = por %p165, %p166
      %p169 = scmp.ne.s32.totalorder %s152, %s168
      %p170 = scmp.eq.s32.totalorder %s28, 0
      %p171 = por %p169, %p170
      %s172 = ssub.s32 %s30, %s37
      %p173 = scmp.eq.s32.totalorder %s172, 0
      %s175 = sadd.s32 %s174, 1
      %s176 = scalar_select %p173, %s174, %s175
      %p179 = pneg %p173
      %p180 = scmp.eq.s32.totalorder %s22, 3
      %p181 = por %p179, %p180
      %p182 = scmp.ne.s32.totalorder %s174, %s177
      %p183 = scmp.eq.s32.totalorder %s22, 0
      %p184 = por %p182, %p183
      %p185 = scmp.ne.s32.totalorder %s174, %s177
      %p186 = scmp.eq.s32.totalorder %s27, 3
      %p187 = por %p185, %p186
      %p188 = scmp.ne.s32.totalorder %s177, %s178
      %p189 = scmp.eq.s32.totalorder %s27, 0
      %p190 = por %p188, %p189
      %p191 = scmp.ne.s32.totalorder %s177, %s178
      %p192 = scmp.eq.s32.totalorder %s28, 3
      %p193 = por %p191, %p192
      %p195 = scmp.ne.s32.totalorder %s178, %s194
      %p196 = scmp.eq.s32.totalorder %s28, 0
      %p197 = por %p195, %p196
      %s198 = ssub.s32 %s30, %s37
      %p199 = scmp.eq.s32.totalorder %s198, 0
      %s201 = sadd.s32 %s200, 1
      %s202 = scalar_select %p199, %s200, %s201
      %p205 = pneg %p199
      %p206 = scmp.eq.s32.totalorder %s22, 3
      %p207 = por %p205, %p206
      %p208 = scmp.ne.s32.totalorder %s200, %s203
      %p209 = scmp.eq.s32.totalorder %s22, 0
      %p210 = por %p208, %p209
      %p211 = scmp.ne.s32.totalorder %s200, %s203
      %p212 = scmp.eq.s32.totalorder %s27, 3
      %p213 = por %p211, %p212
      %p214 = scmp.ne.s32.totalorder %s203, %s204
      %p215 = scmp.eq.s32.totalorder %s27, 0
      %p216 = por %p214, %p215
      %p217 = scmp.ne.s32.totalorder %s203, %s204
      %p218 = scmp.eq.s32.totalorder %s28, 3
      %p219 = por %p217, %p218
      %p221 = scmp.ne.s32.totalorder %s204, %s220
      %p222 = scmp.eq.s32.totalorder %s28, 0
      %p223 = por %p221, %p222
      %s224 = ssub.s32 %s30, %s37
      %p225 = scmp.eq.s32.totalorder %s224, 0
      %s227 = sadd.s32 %s226, 1
      %s228 = scalar_select %p225, %s226, %s227
      %p231 = pneg %p225
      %p232 = scmp.eq.s32.totalorder %s22, 3
      %p233 = por %p231, %p232
      %p234 = scmp.ne.s32.totalorder %s226, %s229
      %p235 = scmp.eq.s32.totalorder %s22, 0
      %p236 = por %p234, %p235
      %p237 = scmp.ne.s32.totalorder %s226, %s229
      %p238 = scmp.eq.s32.totalorder %s27, 3
      %p239 = por %p237, %p238
      %p240 = scmp.ne.s32.totalorder %s229, %s230
      %p241 = scmp.eq.s32.totalorder %s27, 0
      %p242 = por %p240, %p241
      %p243 = scmp.ne.s32.totalorder %s229, %s230
      %p244 = scmp.eq.s32.totalorder %s28, 3
      %p245 = por %p243, %p244
      %p247 = scmp.ne.s32.totalorder %s230, %s246
      %p248 = scmp.eq.s32.totalorder %s28, 0
      %p249 = por %p247, %p248
      %s250 = ssub.s32 %s30, %s37
      %p251 = scmp.eq.s32.totalorder %s250, 0
      %s253 = sadd.s32 %s252, 1
      %s254 = scalar_select %p251, %s252, %s253
      %p257 = pneg %p251
      %p258 = scmp.eq.s32.totalorder %s22, 3
      %p259 = por %p257, %p258
      %p260 = scmp.ne.s32.totalorder %s252, %s255
      %p261 = scmp.eq.s32.totalorder %s22, 0
      %p262 = por %p260, %p261
      %p263 = scmp.ne.s32.totalorder %s252, %s255
      %p264 = scmp.eq.s32.totalorder %s27, 3
      %p265 = por %p263, %p264
      %p266 = scmp.ne.s32.totalorder %s255, %s256
      %p267 = scmp.eq.s32.totalorder %s27, 0
      %p268 = por %p266, %p267
      %p269 = scmp.ne.s32.totalorder %s255, %s256
      %p270 = scmp.eq.s32.totalorder %s28, 3
      %p271 = por %p269, %p270
      %p273 = scmp.ne.s32.totalorder %s256, %s272
      %p274 = scmp.eq.s32.totalorder %s28, 0
      %p275 = por %p273, %p274
      %s276 = ssub.s32 %s30, %s37
      %p277 = scmp.eq.s32.totalorder %s276, 0
      %s279 = sadd.s32 %s278, 1
      %s280 = scalar_select %p277, %s278, %s279
      %p283 = pneg %p277
      %p284 = scmp.eq.s32.totalorder %s22, 3
      %p285 = por %p283, %p284
      %p286 = scmp.ne.s32.totalorder %s278, %s281
      %p287 = scmp.eq.s32.totalorder %s22, 0
      %p288 = por %p286, %p287
      %p289 = scmp.ne.s32.totalorder %s278, %s281
      %p290 = scmp.eq.s32.totalorder %s27, 3
      %p291 = por %p289, %p290
      %p292 = scmp.ne.s32.totalorder %s281, %s282
      %p293 = scmp.eq.s32.totalorder %s27, 0
      %p294 = por %p292, %p293
      %p295 = scmp.ne.s32.totalorder %s281, %s282
      %p296 = scmp.eq.s32.totalorder %s28, 3
      %p297 = por %p295, %p296
      %p299 = scmp.ne.s32.totalorder %s282, %s298
      %p300 = scmp.eq.s32.totalorder %s28, 0
      %p301 = por %p299, %p300
      %s302 = ssub.s32 %s30, %s37
      %p303 = scmp.eq.s32.totalorder %s302, 0
      %s305 = sadd.s32 %s304, 1
      %s306 = scalar_select %p303, %s304, %s305
      %p309 = pneg %p303
      %p310 = scmp.eq.s32.totalorder %s22, 3
      %p311 = por %p309, %p310
      %p312 = scmp.ne.s32.totalorder %s304, %s307
      %p313 = scmp.eq.s32.totalorder %s22, 0
      %p314 = por %p312, %p313
      %p315 = scmp.ne.s32.totalorder %s304, %s307
      %p316 = scmp.eq.s32.totalorder %s27, 3
      %p317 = por %p315, %p316
      %p318 = scmp.ne.s32.totalorder %s307, %s308
      %p319 = scmp.eq.s32.totalorder %s27, 0
      %p320 = por %p318, %p319
      %p321 = scmp.ne.s32.totalorder %s307, %s308
      %p322 = scmp.eq.s32.totalorder %s28, 3
      %p323 = por %p321, %p322
      %p325 = scmp.ne.s32.totalorder %s308, %s324
      %p326 = scmp.eq.s32.totalorder %s28, 0
      %p327 = por %p325, %p326
      %s328 = ssub.s32 %s30, %s37
      %p329 = scmp.eq.s32.totalorder %s328, 0
      %s331 = sadd.s32 %s330, 1
      %s332 = scalar_select %p329, %s330, %s331
      %p335 = pneg %p329
      %p336 = scmp.eq.s32.totalorder %s22, 3
      %p337 = por %p335, %p336
      %p338 = scmp.ne.s32.totalorder %s330, %s333
      %p339 = scmp.eq.s32.totalorder %s22, 0
      %p340 = por %p338, %p339
      %p341 = scmp.ne.s32.totalorder %s330, %s333
      %p342 = scmp.eq.s32.totalorder %s27, 3
      %p343 = por %p341, %p342
      %p344 = scmp.ne.s32.totalorder %s333, %s334
      %p345 = scmp.eq.s32.totalorder %s27, 0
      %p346 = por %p344, %p345
      %p347 = scmp.ne.s32.totalorder %s333, %s334
      %p348 = scmp.eq.s32.totalorder %s28, 3
      %p349 = por %p347, %p348
      %p351 = scmp.ne.s32.totalorder %s334, %s350
      %p352 = scmp.eq.s32.totalorder %s28, 0
      %p353 = por %p351, %p352
      %s354 = ssub.s32 %s30, %s37
      %p355 = scmp.eq.s32.totalorder %s354, 0
      %s357 = sadd.s32 %s356, 1
      %s358 = scalar_select %p355, %s356, %s357
      %p361 = pneg %p355
      %p362 = scmp.eq.s32.totalorder %s22, 3
      %p363 = por %p361, %p362
      %p364 = scmp.ne.s32.totalorder %s356, %s359
      %p365 = scmp.eq.s32.totalorder %s22, 0
      %p366 = por %p364, %p365
      %p367 = scmp.ne.s32.totalorder %s356, %s359
      %p368 = scmp.eq.s32.totalorder %s27, 3
      %p369 = por %p367, %p368
      %p370 = scmp.ne.s32.totalorder %s359, %s360
      %p371 = scmp.eq.s32.totalorder %s27, 0
      %p372 = por %p370, %p371
      %p373 = scmp.ne.s32.totalorder %s359, %s360
      %p374 = scmp.eq.s32.totalorder %s28, 3
      %p375 = por %p373, %p374
      %p377 = scmp.ne.s32.totalorder %s360, %s376
      %p378 = scmp.eq.s32.totalorder %s28, 0
      %p379 = por %p377, %p378
      %s380 = ssub.s32 %s29, %s41
      %p381 = scmp.eq.s32.totalorder %s380, 0
      %s383 = sadd.s32 %s382, 1
      %s384 = scalar_select %p381, %s382, %s383
      %p387 = pneg %p381
      %p388 = scmp.eq.s32.totalorder %s22, 3
      %p389 = por %p387, %p388
      %p390 = scmp.ne.s32.totalorder %s382, %s385
      %p391 = scmp.eq.s32.totalorder %s22, 0
      %p392 = por %p390, %p391
      %p393 = scmp.ne.s32.totalorder %s382, %s385
      %p394 = scmp.eq.s32.totalorder %s27, 3
      %p395 = por %p393, %p394
      %p396 = scmp.ne.s32.totalorder %s385, %s386
      %p397 = scmp.eq.s32.totalorder %s27, 0
      %p398 = por %p396, %p397
      %p399 = scmp.ne.s32.totalorder %s385, %s386
      %p400 = scmp.eq.s32.totalorder %s28, 3
      %p401 = por %p399, %p400
      %p403 = scmp.ne.s32.totalorder %s386, %s402
      %p404 = scmp.eq.s32.totalorder %s28, 0
      %p405 = por %p403, %p404
      %p406 = scmp.le.s32.totalorder 1, %s22
      %p407 = scmp.lt.s32.totalorder %s22, 5
      %p408 = pnand %p406, %p407
      %p409 = pneg %p408
      // Predicated region
      $region9: #{tpu_custom_call.1} parent=5 // pred_check
        _
      $region10: #{tpu_custom_call.1} parent=5 // pred_check_branch
        %411 = sbr.rel (%p408) target = $region12
      $region11: #{tpu_custom_call.1} parent=5 // pred_region
        %s412 = ssub.s32 %s22, 1
      $region12: #{tpu_custom_call.1} parent=5 // pred_fallthru
        _
      %p413 = scmp.lt.s32.totalorder %s22, 4
      // Predicated region
      $region13: #{tpu_custom_call.1} parent=5 // pred_check
        %p414 = pneg %p413
      $region14: #{tpu_custom_call.1} parent=5 // pred_check_branch
        %416 = sbr.rel (%p414) target = $region16
      $region15: #{tpu_custom_call.1} parent=5 // pred_region
        // Predicated region
        $region17: #{tpu_custom_call.1} parent=15 // pred_check
          %p417 = pneg %p54
        $region18: #{tpu_custom_call.1} parent=15 // pred_check_branch
          %419 = sbr.rel (%p417) target = $region20
        $region19: #{tpu_custom_call.1} parent=15 // pred_region
          %s420 = smul.u32 2, %s29
          %p421 = scmp.lt.s32.totalorder %s420, 3
          %s422 = scalar_select %p421, %s420, 3
          %s423 = smul.addr %s422, 8
          %s424 = scalar_lea.vmem %s0, %s423
          %s425 = smul.u32 2, %s29
        $region20: #{tpu_custom_call.1} parent=15 // pred_fallthru
          _
        // Predicated region
        $region21: #{tpu_custom_call.1} parent=15 // pred_check
          %p426 = pneg %p80
        $region22: #{tpu_custom_call.1} parent=15 // pred_check_branch
          %428 = sbr.rel (%p426) target = $region24
        $region23: #{tpu_custom_call.1} parent=15 // pred_region
          %p429 = scmp.lt.s32.totalorder %s30, 1
          %s430 = scalar_select %p429, %s30, 1
          %s431 = smul.addr %s430, 4
          %s432 = smul.addr %s431, 4
          %s433 = scalar_lea.vmem %s1, %s432
        $region24: #{tpu_custom_call.1} parent=15 // pred_fallthru
          _
        // Predicated region
        $region25: #{tpu_custom_call.1} parent=15 // pred_check
          %p434 = pneg %p106
        $region26: #{tpu_custom_call.1} parent=15 // pred_check_branch
          %436 = sbr.rel (%p434) target = $region28
        $region27: #{tpu_custom_call.1} parent=15 // pred_region
          %p437 = scmp.lt.s32.totalorder %s30, 1
          %s438 = scalar_select %p437, %s30, 1
          %s439 = scalar_lea.vmem %s2, %s438
        $region28: #{tpu_custom_call.1} parent=15 // pred_fallthru
          _
        // Predicated region
        $region29: #{tpu_custom_call.1} parent=15 // pred_check
          %p440 = pneg %p132
        $region30: #{tpu_custom_call.1} parent=15 // pred_check_branch
          %442 = sbr.rel (%p440) target = $region32
        $region31: #{tpu_custom_call.1} parent=15 // pred_region
          %p443 = scmp.lt.s32.totalorder %s30, 1
          %s444 = scalar_select %p443, %s30, 1
          %s445 = smul.addr %s444, 4
          %s446 = smul.addr %s445, 4
          %s447 = scalar_lea.vmem %s3, %s446
        $region32: #{tpu_custom_call.1} parent=15 // pred_fallthru
          _
        // Predicated region
        $region33: #{tpu_custom_call.1} parent=15 // pred_check
          %p448 = pneg %p158
        $region34: #{tpu_custom_call.1} parent=15 // pred_check_branch
          %450 = sbr.rel (%p448) target = $region36
        $region35: #{tpu_custom_call.1} parent=15 // pred_region
          %p451 = scmp.lt.s32.totalorder %s30, 1
          %s452 = scalar_select %p451, %s30, 1
          %s453 = scalar_lea.vmem %s4, %s452
        $region36: #{tpu_custom_call.1} parent=15 // pred_fallthru
          _
        // Predicated region
        $region37: #{tpu_custom_call.1} parent=15 // pred_check
          %p454 = pneg %p184
        $region38: #{tpu_custom_call.1} parent=15 // pred_check_branch
          %456 = sbr.rel (%p454) target = $region40
        $region39: #{tpu_custom_call.1} parent=15 // pred_region
          %p457 = scmp.lt.s32.totalorder %s30, 1
          %s458 = scalar_select %p457, %s30, 1
          %s459 = scalar_lea.vmem %s5, %s458
        $region40: #{tpu_custom_call.1} parent=15 // pred_fallthru
          _
        // Predicated region
        $region41: #{tpu_custom_call.1} parent=15 // pred_check
          %p460 = pneg %p210
        $region42: #{tpu_custom_call.1} parent=15 // pred_check_branch
          %462 = sbr.rel (%p460) target = $region44
        $region43: #{tpu_custom_call.1} parent=15 // pred_region
          %p463 = scmp.lt.s32.totalorder %s30, 1
          %s464 = scalar_select %p463, %s30, 1
          %s465 = scalar_lea.vmem %s6, %s464
        $region44: #{tpu_custom_call.1} parent=15 // pred_fallthru
          _
        // Predicated region
        $region45: #{tpu_custom_call.1} parent=15 // pred_check
          %p466 = pneg %p236
        $region46: #{tpu_custom_call.1} parent=15 // pred_check_branch
          %468 = sbr.rel (%p466) target = $region48
        $region47: #{tpu_custom_call.1} parent=15 // pred_region
          %p469 = scmp.lt.s32.totalorder %s30, 1
          %s470 = scalar_select %p469, %s30, 1
          %s471 = scalar_lea.vmem %s7, %s470
        $region48: #{tpu_custom_call.1} parent=15 // pred_fallthru
          _
        // Predicated region
        $region49: #{tpu_custom_call.1} parent=15 // pred_check
          %p472 = pneg %p262
        $region50: #{tpu_custom_call.1} parent=15 // pred_check_branch
          %474 = sbr.rel (%p472) target = $region52
        $region51: #{tpu_custom_call.1} parent=15 // pred_region
          %p475 = scmp.lt.s32.totalorder %s30, 1
          %s476 = scalar_select %p475, %s30, 1
          %s477 = scalar_lea.vmem %s8, %s476
        $region52: #{tpu_custom_call.1} parent=15 // pred_fallthru
          _
        // Predicated region
        $region53: #{tpu_custom_call.1} parent=15 // pred_check
          %p478 = pneg %p288
        $region54: #{tpu_custom_call.1} parent=15 // pred_check_branch
          %480 = sbr.rel (%p478) target = $region56
        $region55: #{tpu_custom_call.1} parent=15 // pred_region
          %p481 = scmp.lt.s32.totalorder %s30, 1
          %s482 = scalar_select %p481, %s30, 1
          %s483 = smul.addr %s482, 4
          %s484 = smul.addr %s483, 4
          %s485 = scalar_lea.vmem %s9, %s484
        $region56: #{tpu_custom_call.1} parent=15 // pred_fallthru
          _
        // Predicated region
        $region57: #{tpu_custom_call.1} parent=15 // pred_check
          %p486 = pneg %p314
        $region58: #{tpu_custom_call.1} parent=15 // pred_check_branch
          %488 = sbr.rel (%p486) target = $region60
        $region59: #{tpu_custom_call.1} parent=15 // pred_region
          %p489 = scmp.lt.s32.totalorder %s30, 1
          %s490 = scalar_select %p489, %s30, 1
          %s491 = scalar_lea.vmem %s10, %s490
        $region60: #{tpu_custom_call.1} parent=15 // pred_fallthru
          _
        // Predicated region
        $region61: #{tpu_custom_call.1} parent=15 // pred_check
          %p492 = pneg %p340
        $region62: #{tpu_custom_call.1} parent=15 // pred_check_branch
          %494 = sbr.rel (%p492) target = $region64
        $region63: #{tpu_custom_call.1} parent=15 // pred_region
          %p495 = scmp.lt.s32.totalorder %s30, 1
          %s496 = scalar_select %p495, %s30, 1
          %s497 = smul.addr %s496, 16
          %s498 = smul.addr %s497, 4
          %s499 = scalar_lea.vmem %s11, %s498
        $region64: #{tpu_custom_call.1} parent=15 // pred_fallthru
          _
        // Predicated region
        $region65: #{tpu_custom_call.1} parent=15 // pred_check
          %p500 = pneg %p366
        $region66: #{tpu_custom_call.1} parent=15 // pred_check_branch
          %502 = sbr.rel (%p500) target = $region68
        $region67: #{tpu_custom_call.1} parent=15 // pred_region
          %p503 = scmp.lt.s32.totalorder %s30, 1
          %s504 = scalar_select %p503, %s30, 1
          %s505 = scalar_lea.vmem %s12, %s504
        $region68: #{tpu_custom_call.1} parent=15 // pred_fallthru
          _
      $region16: #{tpu_custom_call.1} parent=5 // pred_fallthru
        _
      %p506 = scmp.le.s32.totalorder 1, %s22
      %p507 = scmp.lt.s32.totalorder %s22, 5
      %p508 = pnand %p506, %p507
      %p509 = pneg %p508
      // Predicated region
      $region69: #{tpu_custom_call.1} parent=5 // pred_check
        _
      $region70: #{tpu_custom_call.1} parent=5 // pred_check_branch
        %511 = sbr.rel (%p508) target = $region72
      $region71: #{tpu_custom_call.1} parent=5 // pred_region
        %s512 = ssub.s32 %s22, 1
        %s513 = smul.u32 2, %s31
        %p514 = scmp.lt.s32.totalorder %s513, 3
        %s515 = scalar_select %p514, %s513, 3
        %s516 = smul.addr %s515, 8
        %s517 = scalar_lea.vmem %s0, %s516
        %p518 = pneg %p60
        %p519 = pneg %p57
        %p520 = scmp.lt.s32.totalorder %s32, 1
        %s521 = scalar_select %p520, %s32, 1
        %s522 = smul.addr %s521, 4
        %s523 = smul.addr %s522, 4
        %s524 = scalar_lea.vmem %s1, %s523
        %p525 = pneg %p86
        %p526 = pneg %p83
        %p527 = scmp.lt.s32.totalorder %s32, 1
        %s528 = scalar_select %p527, %s32, 1
        %s529 = scalar_lea.vmem %s2, %s528
        %p530 = pneg %p112
        %p531 = pneg %p109
        %p532 = scmp.lt.s32.totalorder %s32, 1
        %s533 = scalar_select %p532, %s32, 1
        %s534 = smul.addr %s533, 4
        %s535 = smul.addr %s534, 4
        %s536 = scalar_lea.vmem %s3, %s535
        %p537 = pneg %p138
        %p538 = pneg %p135
        %p539 = scmp.lt.s32.totalorder %s32, 1
        %s540 = scalar_select %p539, %s32, 1
        %s541 = scalar_lea.vmem %s4, %s540
        %p542 = pneg %p164
        %p543 = pneg %p161
        %p544 = scmp.lt.s32.totalorder %s32, 1
        %s545 = scalar_select %p544, %s32, 1
        %s546 = scalar_lea.vmem %s5, %s545
        %p547 = pneg %p190
        %p548 = pneg %p187
        %p549 = scmp.lt.s32.totalorder %s32, 1
        %s550 = scalar_select %p549, %s32, 1
        %s551 = scalar_lea.vmem %s6, %s550
        %p552 = pneg %p216
        %p553 = pneg %p213
        %p554 = scmp.lt.s32.totalorder %s32, 1
        %s555 = scalar_select %p554, %s32, 1
        %s556 = scalar_lea.vmem %s7, %s555
        %p557 = pneg %p242
        %p558 = pneg %p239
        %p559 = scmp.lt.s32.totalorder %s32, 1
        %s560 = scalar_select %p559, %s32, 1
        %s561 = scalar_lea.vmem %s8, %s560
        %p562 = pneg %p268
        %p563 = pneg %p265
        %p564 = scmp.lt.s32.totalorder %s32, 1
        %s565 = scalar_select %p564, %s32, 1
        %s566 = smul.addr %s565, 4
        %s567 = smul.addr %s566, 4
        %s568 = scalar_lea.vmem %s9, %s567
        %p569 = pneg %p294
        %p570 = pneg %p291
        %p571 = scmp.lt.s32.totalorder %s32, 1
        %s572 = scalar_select %p571, %s32, 1
        %s573 = scalar_lea.vmem %s10, %s572
        %p574 = pneg %p320
        %p575 = pneg %p317
        %p576 = scmp.lt.s32.totalorder %s32, 1
        %s577 = scalar_select %p576, %s32, 1
        %s578 = smul.addr %s577, 16
        %s579 = smul.addr %s578, 4
        %s580 = scalar_lea.vmem %s11, %s579
        %p581 = pneg %p346
        %p582 = pneg %p343
        %p583 = scmp.lt.s32.totalorder %s32, 1
        %s584 = scalar_select %p583, %s32, 1
        %s585 = scalar_lea.vmem %s12, %s584
        %p586 = pneg %p372
        %p587 = pneg %p369
        %p588 = pneg %p398
        %p589 = pneg %p395
        %s590 = sand.u32 %s385, 1
        %s591 = scalar_lea.sflag [#allocation6], %s590
        %s592 = sand.u32 %s385, 1
        %s593 = smul.addr %s592, 16
        %s594 = scalar_lea.vmem [#allocation5], %s593
        %s595 = smul.u32 2, %s31
        %p596 = scmp.lt.s32.totalorder %s595, 3
        %s597 = scalar_select %p596, %s595, 3
        %s598 = smul.addr %s597, 8
        %s599 = scalar_lea.vmem %s0, %s598
        %s600 = smul.u32 2, %s31
        %p601 = scmp.lt.s32.totalorder %s32, 1
        %s602 = scalar_select %p601, %s32, 1
        %s603 = smul.addr %s602, 4
        %s604 = smul.addr %s603, 4
        %s605 = scalar_lea.vmem %s1, %s604
        %p606 = scmp.lt.s32.totalorder %s32, 1
        %s607 = scalar_select %p606, %s32, 1
        %s608 = scalar_lea.vmem %s2, %s607
        %p609 = scmp.lt.s32.totalorder %s32, 1
        %s610 = scalar_select %p609, %s32, 1
        %s611 = smul.addr %s610, 4
        %s612 = smul.addr %s611, 4
        %s613 = scalar_lea.vmem %s3, %s612
        %p614 = scmp.lt.s32.totalorder %s32, 1
        %s615 = scalar_select %p614, %s32, 1
        %s616 = scalar_lea.vmem %s4, %s615
        %p617 = scmp.lt.s32.totalorder %s32, 1
        %s618 = scalar_select %p617, %s32, 1
        %s619 = scalar_lea.vmem %s5, %s618
        %p620 = scmp.lt.s32.totalorder %s32, 1
        %s621 = scalar_select %p620, %s32, 1
        %s622 = scalar_lea.vmem %s6, %s621
        %p623 = scmp.lt.s32.totalorder %s32, 1
        %s624 = scalar_select %p623, %s32, 1
        %s625 = scalar_lea.vmem %s7, %s624
        %p626 = scmp.lt.s32.totalorder %s32, 1
        %s627 = scalar_select %p626, %s32, 1
        %s628 = scalar_lea.vmem %s8, %s627
        %p629 = scmp.lt.s32.totalorder %s32, 1
        %s630 = scalar_select %p629, %s32, 1
        %s631 = smul.addr %s630, 4
        %s632 = smul.addr %s631, 4
        %s633 = scalar_lea.vmem %s9, %s632
        %p634 = scmp.lt.s32.totalorder %s32, 1
        %s635 = scalar_select %p634, %s32, 1
        %s636 = scalar_lea.vmem %s10, %s635
        %p637 = scmp.lt.s32.totalorder %s32, 1
        %s638 = scalar_select %p637, %s32, 1
        %s639 = smul.addr %s638, 16
        %s640 = smul.addr %s639, 4
        %s641 = scalar_lea.vmem %s11, %s640
        %p642 = scmp.lt.s32.totalorder %s32, 1
        %s643 = scalar_select %p642, %s32, 1
        %s644 = scalar_lea.vmem %s12, %s643
        %s645 = smul.u32 2, %s31
        %p647 = scmp.eq.s32.totalorder %s32, 0
        // Predicated region
        $region73: #{tpu_custom_call.1} parent=71 // pred_check
          %p648 = pneg %p647
        $region74: #{tpu_custom_call.1} parent=71 // pred_check_branch
          %650 = sbr.rel (%p648) target = $region76
        $region75: #{tpu_custom_call.1} parent=71 // pred_region
          %v651 = vld [vmem:[%s599] sm:$0xff]
          %v652 = vld [vmem:[%s599 + $0x8] sm:$0xff]
          %vm653 = vcmask 261120
          %654 = vst.msk [vmem:[#allocation2] sm:$0xff] %vm653, %v651
          %655 = vst.msk [vmem:[#allocation2 + $0x8] sm:$0xff] %vm653, %v652
        $region76: #{tpu_custom_call.1} parent=71 // pred_fallthru
          _
        %v656 = vld [vmem:[#allocation2] sm:$0xff]
        %v657 = vld [vmem:[#allocation2 + $0x8] sm:$0xff]
        %v658 = vpack.c.bf16 %v657, %v656
        %v659 = vld [vmem:[%s605] sm:$0xf]
        %v660 = vld [vmem:[%s605 + $0x4] sm:$0xf]
        %v661 = vld [vmem:[%s605 + $0x8] sm:$0xf]
        %v662 = vld [vmem:[%s605 + $0xc] sm:$0xf]
        %v663 = vld [vmem:[%s608] sm:$0x1]
        %v665 = vperm.slane %v663, 0
        %v671 = vunpack.c.l.b16 %v659
        %v672 = vunpack.c.l.b16 %v660
        %v673 = vunpack.c.l.b16 %v661
        %v674 = vunpack.c.l.b16 %v662
        %v675 = vpack.c.b16 %v672, %v671
        %v676 = vpack.c.b16 %v674, %v673
        %vm679 = vcmask 261120
        %v681 = vsel %vm679, %v658, 0
        %683 = vmatpush.bf16.msra.mxu0 0
        %684 = vmatpush.bf16.msra.mxu0 0
        %685 = vmatpush.bf16.msra.mxu0 0
        %686 = vmatpush.bf16.msra.mxu0 0
        %687 = vmatpush.bf16.msra.mxu0 0
        %688 = vmatpush.bf16.msra.mxu0 0
        %689 = vmatpush.bf16.msra.mxu0 %v676
        %690 = vmatpush.bf16.msra.mxu0 %v675
        %691 = vmatmul.bf16.gmra.mxu0 %v681
        %v692 = vpop.f32.mrf.mxu0
        %v693 = vadd.f32 %v665, %v692
        %v694 = vpop.f32.mrf.mxu0
        %v695 = vadd.f32 %v665, %v694
        %696 = vdwg.mxu0
        %699 = vrot.lane.b32.xlu0 %v693, 120
        %v700 = vpop.permute.xlu0 %699
        %701 = vrot.lane.b32.xlu0 %v695, 120
        %v702 = vpop.permute.xlu0 %701
        %705 = vrot.lane.b32.xlu0 %v693, 112
        %v706 = vpop.permute.xlu0 %705
        %707 = vrot.lane.b32.xlu0 %v695, 112
        %v708 = vpop.permute.xlu0 %707
        %711 = vrot.lane.b32.xlu0 %v693, 104
        %v712 = vpop.permute.xlu0 %711
        %713 = vrot.lane.b32.xlu0 %v695, 104
        %v714 = vpop.permute.xlu0 %713
        %717 = vrot.lane.b32.xlu0 %v693, 96
        %v718 = vpop.permute.xlu0 %717
        %719 = vrot.lane.b32.xlu0 %v695, 96
        %v720 = vpop.permute.xlu0 %719
        %723 = vrot.lane.b32.xlu0 %v693, 88
        %v724 = vpop.permute.xlu0 %723
        %725 = vrot.lane.b32.xlu0 %v695, 88
        %v726 = vpop.permute.xlu0 %725
        %729 = vrot.lane.b32.xlu0 %v693, 80
        %v730 = vpop.permute.xlu0 %729
        %731 = vrot.lane.b32.xlu0 %v695, 80
        %v732 = vpop.permute.xlu0 %731
        %735 = vrot.lane.b32.xlu0 %v693, 72
        %v736 = vpop.permute.xlu0 %735
        %737 = vrot.lane.b32.xlu0 %v695, 72
        %v738 = vpop.permute.xlu0 %737
        %741 = vrot.lane.b32.xlu0 %v693, 64
        %v742 = vpop.permute.xlu0 %741
        %743 = vrot.lane.b32.xlu0 %v695, 64
        %v744 = vpop.permute.xlu0 %743
        %747 = vrot.lane.b32.xlu0 %v693, 56
        %v748 = vpop.permute.xlu0 %747
        %749 = vrot.lane.b32.xlu0 %v695, 56
        %v750 = vpop.permute.xlu0 %749
        %753 = vrot.lane.b32.xlu0 %v693, 48
        %v754 = vpop.permute.xlu0 %753
        %755 = vrot.lane.b32.xlu0 %v695, 48
        %v756 = vpop.permute.xlu0 %755
        %759 = vrot.lane.b32.xlu0 %v693, 40
        %v760 = vpop.permute.xlu0 %759
        %761 = vrot.lane.b32.xlu0 %v695, 40
        %v762 = vpop.permute.xlu0 %761
        %v765 = vrot.slane %v706, 4
        %vm766 = vcmask 1047556
        %v767 = vsel %vm766, %v765, %v693
        %v768 = vrot.slane %v693, 4
        %v769 = vsel %vm766, %v706, %v768
        %v771 = vunpack.c.l.s4 1983009808
        %v772 = vunpack.c.0.s8 %v771
        %v773 = vperm.slane %v767, %v772
        %v775 = vunpack.c.l.s4 1983009808
        %v776 = vunpack.c.0.s8 %v775
        %v777 = vperm.slane %v769, %v776
        %v778 = vrot.slane %v712, 4
        %v779 = vsel %vm766, %v778, %v700
        %v780 = vrot.slane %v700, 4
        %v781 = vsel %vm766, %v712, %v780
        %v783 = vunpack.c.l.s4 1983009808
        %v784 = vunpack.c.0.s8 %v783
        %v785 = vperm.slane %v779, %v784
        %v787 = vunpack.c.l.s4 1983009808
        %v788 = vunpack.c.0.s8 %v787
        %v789 = vperm.slane %v781, %v788
        %v790 = vrot.slane %v730, 4
        %v791 = vsel %vm766, %v790, %v718
        %v792 = vrot.slane %v718, 4
        %v793 = vsel %vm766, %v730, %v792
        %v795 = vunpack.c.l.s4 1983009808
        %v796 = vunpack.c.0.s8 %v795
        %v797 = vperm.slane %v791, %v796
        %v799 = vunpack.c.l.s4 1983009808
        %v800 = vunpack.c.0.s8 %v799
        %v801 = vperm.slane %v793, %v800
        %v802 = vrot.slane %v736, 4
        %v803 = vsel %vm766, %v802, %v724
        %v804 = vrot.slane %v724, 4
        %v805 = vsel %vm766, %v736, %v804
        %v807 = vunpack.c.l.s4 1983009808
        %v808 = vunpack.c.0.s8 %v807
        %v809 = vperm.slane %v803, %v808
        %v811 = vunpack.c.l.s4 1983009808
        %v812 = vunpack.c.0.s8 %v811
        %v813 = vperm.slane %v805, %v812
        %v814 = vrot.slane %v785, 4
        %v815 = vsel %vm766, %v814, %v773
        %v816 = vrot.slane %v773, 4
        %v817 = vsel %vm766, %v785, %v816
        %v819 = vunpack.c.l.s4 1934713408
        %v820 = vunpack.c.0.s8 %v819
        %v821 = vperm.slane %v815, %v820
        %v823 = vunpack.c.l.s4 1934713408
        %v824 = vunpack.c.0.s8 %v823
        %v825 = vperm.slane %v817, %v824
        %v826 = vrot.slane %v789, 4
        %v827 = vsel %vm766, %v826, %v777
        %v828 = vrot.slane %v777, 4
        %v829 = vsel %vm766, %v789, %v828
        %v831 = vunpack.c.l.s4 1934713408
        %v832 = vunpack.c.0.s8 %v831
        %v833 = vperm.slane %v827, %v832
        %v835 = vunpack.c.l.s4 1934713408
        %v836 = vunpack.c.0.s8 %v835
        %v837 = vperm.slane %v829, %v836
        %v838 = vrot.slane %v809, 4
        %v839 = vsel %vm766, %v838, %v797
        %v840 = vrot.slane %v797, 4
        %v841 = vsel %vm766, %v809, %v840
        %v843 = vunpack.c.l.s4 1934713408
        %v844 = vunpack.c.0.s8 %v843
        %v845 = vperm.slane %v839, %v844
        %v847 = vunpack.c.l.s4 1934713408
        %v848 = vunpack.c.0.s8 %v847
        %v849 = vperm.slane %v841, %v848
        %v850 = vrot.slane %v813, 4
        %v851 = vsel %vm766, %v850, %v801
        %v852 = vrot.slane %v801, 4
        %v853 = vsel %vm766, %v813, %v852
        %v855 = vunpack.c.l.s4 1934713408
        %v856 = vunpack.c.0.s8 %v855
        %v857 = vperm.slane %v851, %v856
        %v859 = vunpack.c.l.s4 1934713408
        %v860 = vunpack.c.0.s8 %v859
        %v861 = vperm.slane %v853, %v860
        %v862 = vrot.slane %v845, 4
        %v863 = vsel %vm766, %v862, %v821
        %v864 = vrot.slane %v821, 4
        %v865 = vsel %vm766, %v845, %v864
        %v866 = vrot.slane %v849, 4
        %v867 = vsel %vm766, %v866, %v825
        %v868 = vrot.slane %v825, 4
        %v869 = vsel %vm766, %v849, %v868
        %v870 = vrot.slane %v857, 4
        %v871 = vsel %vm766, %v870, %v833
        %v872 = vrot.slane %v833, 4
        %v873 = vsel %vm766, %v857, %v872
        %v874 = vrot.slane %v861, 4
        %v875 = vsel %vm766, %v874, %v837
        %v876 = vrot.slane %v837, 4
        %v877 = vsel %vm766, %v861, %v876
        %v878 = vrot.slane %v754, 4
        %v879 = vsel %vm766, %v878, %v742
        %v880 = vrot.slane %v742, 4
        %v881 = vsel %vm766, %v754, %v880
        %v883 = vunpack.c.l.s4 1983009808
        %v884 = vunpack.c.0.s8 %v883
        %v885 = vperm.slane %v879, %v884
        %v887 = vunpack.c.l.s4 1983009808
        %v888 = vunpack.c.0.s8 %v887
        %v889 = vperm.slane %v881, %v888
        %v890 = vrot.slane %v760, 4
        %v891 = vsel %vm766, %v890, %v748
        %v892 = vrot.slane %v748, 4
        %v893 = vsel %vm766, %v760, %v892
        %v895 = vunpack.c.l.s4 1983009808
        %v896 = vunpack.c.0.s8 %v895
        %v897 = vperm.slane %v891, %v896
        %v899 = vunpack.c.l.s4 1983009808
        %v900 = vunpack.c.0.s8 %v899
        %v901 = vperm.slane %v893, %v900
        %v902 = vrot.slane %v897, 4
        %v903 = vsel %vm766, %v902, %v885
        %v904 = vrot.slane %v885, 4
        %v905 = vsel %vm766, %v897, %v904
        %v907 = vunpack.c.l.s4 1934713408
        %v908 = vunpack.c.0.s8 %v907
        %v909 = vperm.slane %v903, %v908
        %v911 = vunpack.c.l.s4 1934713408
        %v912 = vunpack.c.0.s8 %v911
        %v913 = vperm.slane %v905, %v912
        %v914 = vrot.slane %v901, 4
        %v915 = vsel %vm766, %v914, %v889
        %v916 = vrot.slane %v889, 4
        %v917 = vsel %vm766, %v901, %v916
        %v919 = vunpack.c.l.s4 1934713408
        %v920 = vunpack.c.0.s8 %v919
        %v921 = vperm.slane %v915, %v920
        %v923 = vunpack.c.l.s4 1934713408
        %v924 = vunpack.c.0.s8 %v923
        %v925 = vperm.slane %v917, %v924
        %v926 = vrot.slane %v909, 4
        %v927 = vsel %vm766, 0.0, %v926
        %v928 = vrot.slane %v913, 4
        %v929 = vsel %vm766, 0.0, %v928
        %v930 = vrot.slane %v921, 4
        %v931 = vsel %vm766, 0.0, %v930
        %v932 = vrot.slane %v925, 4
        %v933 = vsel %vm766, 0.0, %v932
        %v934 = vrot.slane %v708, 4
        %v935 = vsel %vm766, %v934, %v695
        %v936 = vrot.slane %v695, 4
        %v937 = vsel %vm766, %v708, %v936
        %v939 = vunpack.c.l.s4 1983009808
        %v940 = vunpack.c.0.s8 %v939
        %v941 = vperm.slane %v935, %v940
        %v943 = vunpack.c.l.s4 1983009808
        %v944 = vunpack.c.0.s8 %v943
        %v945 = vperm.slane %v937, %v944
        %v946 = vrot.slane %v714, 4
        %v947 = vsel %vm766, %v946, %v702
        %v948 = vrot.slane %v702, 4
        %v949 = vsel %vm766, %v714, %v948
        %v951 = vunpack.c.l.s4 1983009808
        %v952 = vunpack.c.0.s8 %v951
        %v953 = vperm.slane %v947, %v952
        %v955 = vunpack.c.l.s4 1983009808
        %v956 = vunpack.c.0.s8 %v955
        %v957 = vperm.slane %v949, %v956
        %v958 = vrot.slane %v732, 4
        %v959 = vsel %vm766, %v958, %v720
        %v960 = vrot.slane %v720, 4
        %v961 = vsel %vm766, %v732, %v960
        %v963 = vunpack.c.l.s4 1983009808
        %v964 = vunpack.c.0.s8 %v963
        %v965 = vperm.slane %v959, %v964
        %v967 = vunpack.c.l.s4 1983009808
        %v968 = vunpack.c.0.s8 %v967
        %v969 = vperm.slane %v961, %v968
        %v970 = vrot.slane %v738, 4
        %v971 = vsel %vm766, %v970, %v726
        %v972 = vrot.slane %v726, 4
        %v973 = vsel %vm766, %v738, %v972
        %v975 = vunpack.c.l.s4 1983009808
        %v976 = vunpack.c.0.s8 %v975
        %v977 = vperm.slane %v971, %v976
        %v979 = vunpack.c.l.s4 1983009808
        %v980 = vunpack.c.0.s8 %v979
        %v981 = vperm.slane %v973, %v980
        %v982 = vrot.slane %v953, 4
        %v983 = vsel %vm766, %v982, %v941
        %v984 = vrot.slane %v941, 4
        %v985 = vsel %vm766, %v953, %v984
        %v987 = vunpack.c.l.s4 1934713408
        %v988 = vunpack.c.0.s8 %v987
        %v989 = vperm.slane %v983, %v988
        %v991 = vunpack.c.l.s4 1934713408
        %v992 = vunpack.c.0.s8 %v991
        %v993 = vperm.slane %v985, %v992
        %v994 = vrot.slane %v957, 4
        %v995 = vsel %vm766, %v994, %v945
        %v996 = vrot.slane %v945, 4
        %v997 = vsel %vm766, %v957, %v996
        %v999 = vunpack.c.l.s4 1934713408
        %v1000 = vunpack.c.0.s8 %v999
        %v1001 = vperm.slane %v995, %v1000
        %v1003 = vunpack.c.l.s4 1934713408
        %v1004 = vunpack.c.0.s8 %v1003
        %v1005 = vperm.slane %v997, %v1004
        %v1006 = vrot.slane %v977, 4
        %v1007 = vsel %vm766, %v1006, %v965
        %v1008 = vrot.slane %v965, 4
        %v1009 = vsel %vm766, %v977, %v1008
        %v1011 = vunpack.c.l.s4 1934713408
        %v1012 = vunpack.c.0.s8 %v1011
        %v1013 = vperm.slane %v1007, %v1012
        %v1015 = vunpack.c.l.s4 1934713408
        %v1016 = vunpack.c.0.s8 %v1015
        %v1017 = vperm.slane %v1009, %v1016
        %v1018 = vrot.slane %v981, 4
        %v1019 = vsel %vm766, %v1018, %v969
        %v1020 = vrot.slane %v969, 4
        %v1021 = vsel %vm766, %v981, %v1020
        %v1023 = vunpack.c.l.s4 1934713408
        %v1024 = vunpack.c.0.s8 %v1023
        %v1025 = vperm.slane %v1019, %v1024
        %v1027 = vunpack.c.l.s4 1934713408
        %v1028 = vunpack.c.0.s8 %v1027
        %v1029 = vperm.slane %v1021, %v1028
        %v1030 = vrot.slane %v1013, 4
        %v1031 = vsel %vm766, %v1030, %v989
        %v1032 = vrot.slane %v989, 4
        %v1033 = vsel %vm766, %v1013, %v1032
        %v1034 = vrot.slane %v1017, 4
        %v1035 = vsel %vm766, %v1034, %v993
        %v1036 = vrot.slane %v993, 4
        %v1037 = vsel %vm766, %v1017, %v1036
        %v1038 = vrot.slane %v1025, 4
        %v1039 = vsel %vm766, %v1038, %v1001
        %v1040 = vrot.slane %v1001, 4
        %v1041 = vsel %vm766, %v1025, %v1040
        %v1042 = vrot.slane %v1029, 4
        %v1043 = vsel %vm766, %v1042, %v1005
        %v1044 = vrot.slane %v1005, 4
        %v1045 = vsel %vm766, %v1029, %v1044
        %v1046 = vrot.slane %v756, 4
        %v1047 = vsel %vm766, %v1046, %v744
        %v1048 = vrot.slane %v744, 4
        %v1049 = vsel %vm766, %v756, %v1048
        %v1051 = vunpack.c.l.s4 1983009808
        %v1052 = vunpack.c.0.s8 %v1051
        %v1053 = vperm.slane %v1047, %v1052
        %v1055 = vunpack.c.l.s4 1983009808
        %v1056 = vunpack.c.0.s8 %v1055
        %v1057 = vperm.slane %v1049, %v1056
        %v1058 = vrot.slane %v762, 4
        %v1059 = vsel %vm766, %v1058, %v750
        %v1060 = vrot.slane %v750, 4
        %v1061 = vsel %vm766, %v762, %v1060
        %v1063 = vunpack.c.l.s4 1983009808
        %v1064 = vunpack.c.0.s8 %v1063
        %v1065 = vperm.slane %v1059, %v1064
        %v1067 = vunpack.c.l.s4 1983009808
        %v1068 = vunpack.c.0.s8 %v1067
        %v1069 = vperm.slane %v1061, %v1068
        %v1070 = vrot.slane %v1065, 4
        %v1071 = vsel %vm766, %v1070, %v1053
        %v1072 = vrot.slane %v1053, 4
        %v1073 = vsel %vm766, %v1065, %v1072
        %v1075 = vunpack.c.l.s4 1934713408
        %v1076 = vunpack.c.0.s8 %v1075
        %v1077 = vperm.slane %v1071, %v1076
        %v1079 = vunpack.c.l.s4 1934713408
        %v1080 = vunpack.c.0.s8 %v1079
        %v1081 = vperm.slane %v1073, %v1080
        %v1082 = vrot.slane %v1069, 4
        %v1083 = vsel %vm766, %v1082, %v1057
        %v1084 = vrot.slane %v1057, 4
        %v1085 = vsel %vm766, %v1069, %v1084
        %v1087 = vunpack.c.l.s4 1934713408
        %v1088 = vunpack.c.0.s8 %v1087
        %v1089 = vperm.slane %v1083, %v1088
        %v1091 = vunpack.c.l.s4 1934713408
        %v1092 = vunpack.c.0.s8 %v1091
        %v1093 = vperm.slane %v1085, %v1092
        %v1094 = vrot.slane %v1077, 4
        %v1095 = vsel %vm766, 0.0, %v1094
        %v1096 = vrot.slane %v1081, 4
        %v1097 = vsel %vm766, 0.0, %v1096
        %v1098 = vrot.slane %v1089, 4
        %v1099 = vsel %vm766, 0.0, %v1098
        %v1100 = vrot.slane %v1093, 4
        %v1101 = vsel %vm766, 0.0, %v1100
        %v1102 = vrot.slane %v867, 4
        %v1103 = vsel %vm766, %v1102, %v863
        %v1104 = vrot.slane %v863, 4
        %v1105 = vsel %vm766, %v867, %v1104
        %v1107 = vunpack.c.l.s4 1983009808
        %v1108 = vunpack.c.0.s8 %v1107
        %v1109 = vperm.slane %v1103, %v1108
        %v1111 = vunpack.c.l.s4 1983009808
        %v1112 = vunpack.c.0.s8 %v1111
        %v1113 = vperm.slane %v1105, %v1112
        %v1114 = vrot.slane %v869, 4
        %v1115 = vsel %vm766, %v1114, %v865
        %v1116 = vrot.slane %v865, 4
        %v1117 = vsel %vm766, %v869, %v1116
        %v1119 = vunpack.c.l.s4 1983009808
        %v1120 = vunpack.c.0.s8 %v1119
        %v1121 = vperm.slane %v1115, %v1120
        %v1123 = vunpack.c.l.s4 1983009808
        %v1124 = vunpack.c.0.s8 %v1123
        %v1125 = vperm.slane %v1117, %v1124
        %v1126 = vrot.slane %v875, 4
        %v1127 = vsel %vm766, %v1126, %v871
        %v1128 = vrot.slane %v871, 4
        %v1129 = vsel %vm766, %v875, %v1128
        %v1131 = vunpack.c.l.s4 1983009808
        %v1132 = vunpack.c.0.s8 %v1131
        %v1133 = vperm.slane %v1127, %v1132
        %v1135 = vunpack.c.l.s4 1983009808
        %v1136 = vunpack.c.0.s8 %v1135
        %v1137 = vperm.slane %v1129, %v1136
        %v1138 = vrot.slane %v877, 4
        %v1139 = vsel %vm766, %v1138, %v873
        %v1140 = vrot.slane %v873, 4
        %v1141 = vsel %vm766, %v877, %v1140
        %v1143 = vunpack.c.l.s4 1983009808
        %v1144 = vunpack.c.0.s8 %v1143
        %v1145 = vperm.slane %v1139, %v1144
        %v1147 = vunpack.c.l.s4 1983009808
        %v1148 = vunpack.c.0.s8 %v1147
        %v1149 = vperm.slane %v1141, %v1148
        %v1150 = vrot.slane %v1121, 4
        %v1151 = vsel %vm766, %v1150, %v1109
        %v1152 = vrot.slane %v1109, 4
        %v1153 = vsel %vm766, %v1121, %v1152
        %v1155 = vunpack.c.l.s4 1934713408
        %v1156 = vunpack.c.0.s8 %v1155
        %v1157 = vperm.slane %v1151, %v1156
        %v1159 = vunpack.c.l.s4 1934713408
        %v1160 = vunpack.c.0.s8 %v1159
        %v1161 = vperm.slane %v1153, %v1160
        %v1162 = vrot.slane %v1125, 4
        %v1163 = vsel %vm766, %v1162, %v1113
        %v1164 = vrot.slane %v1113, 4
        %v1165 = vsel %vm766, %v1125, %v1164
        %v1167 = vunpack.c.l.s4 1934713408
        %v1168 = vunpack.c.0.s8 %v1167
        %v1169 = vperm.slane %v1163, %v1168
        %v1171 = vunpack.c.l.s4 1934713408
        %v1172 = vunpack.c.0.s8 %v1171
        %v1173 = vperm.slane %v1165, %v1172
        %v1174 = vrot.slane %v1145, 4
        %v1175 = vsel %vm766, %v1174, %v1133
        %v1176 = vrot.slane %v1133, 4
        %v1177 = vsel %vm766, %v1145, %v1176
        %v1179 = vunpack.c.l.s4 1934713408
        %v1180 = vunpack.c.0.s8 %v1179
        %v1181 = vperm.slane %v1175, %v1180
        %v1183 = vunpack.c.l.s4 1934713408
        %v1184 = vunpack.c.0.s8 %v1183
        %v1185 = vperm.slane %v1177, %v1184
        %v1186 = vrot.slane %v1149, 4
        %v1187 = vsel %vm766, %v1186, %v1137
        %v1188 = vrot.slane %v1137, 4
        %v1189 = vsel %vm766, %v1149, %v1188
        %v1191 = vunpack.c.l.s4 1934713408
        %v1192 = vunpack.c.0.s8 %v1191
        %v1193 = vperm.slane %v1187, %v1192
        %v1195 = vunpack.c.l.s4 1934713408
        %v1196 = vunpack.c.0.s8 %v1195
        %v1197 = vperm.slane %v1189, %v1196
        %v1198 = vrot.slane %v1181, 4
        %v1199 = vsel %vm766, %v1198, %v1157
        %v1200 = vrot.slane %v1157, 4
        %v1201 = vsel %vm766, %v1181, %v1200
        %v1202 = vrot.slane %v1185, 4
        %v1203 = vsel %vm766, %v1202, %v1161
        %v1204 = vrot.slane %v1161, 4
        %v1205 = vsel %vm766, %v1185, %v1204
        %v1206 = vrot.slane %v1193, 4
        %v1207 = vsel %vm766, %v1206, %v1169
        %v1208 = vrot.slane %v1169, 4
        %v1209 = vsel %vm766, %v1193, %v1208
        %v1210 = vrot.slane %v1197, 4
        %v1211 = vsel %vm766, %v1210, %v1173
        %v1212 = vrot.slane %v1173, 4
        %v1213 = vsel %vm766, %v1197, %v1212
        %v1214 = vsel %vm766, %v928, %v909
        %v1216 = vunpack.c.l.s4 1983009808
        %v1217 = vunpack.c.0.s8 %v1216
        %v1218 = vperm.slane %v1214, %v1217
        %v1219 = vrot.slane %v929, 4
        %v1220 = vsel %vm766, %v1219, %v927
        %v1222 = vunpack.c.l.s4 1983009808
        %v1223 = vunpack.c.0.s8 %v1222
        %v1224 = vperm.slane %v1220, %v1223
        %v1225 = vsel %vm766, %v932, %v921
        %v1227 = vunpack.c.l.s4 1983009808
        %v1228 = vunpack.c.0.s8 %v1227
        %v1229 = vperm.slane %v1225, %v1228
        %v1230 = vrot.slane %v933, 4
        %v1231 = vsel %vm766, %v1230, %v931
        %v1233 = vunpack.c.l.s4 1983009808
        %v1234 = vunpack.c.0.s8 %v1233
        %v1235 = vperm.slane %v1231, %v1234
        %v1236 = vrot.slane %v1224, 4
        %v1237 = vsel %vm766, %v1236, %v1218
        %v1238 = vrot.slane %v1218, 4
        %v1239 = vsel %vm766, %v1224, %v1238
        %v1241 = vunpack.c.l.s4 1934713408
        %v1242 = vunpack.c.0.s8 %v1241
        %v1243 = vperm.slane %v1237, %v1242
        %v1245 = vunpack.c.l.s4 1934713408
        %v1246 = vunpack.c.0.s8 %v1245
        %v1247 = vperm.slane %v1239, %v1246
        %v1248 = vrot.slane %v1235, 4
        %v1249 = vsel %vm766, %v1248, %v1229
        %v1250 = vrot.slane %v1229, 4
        %v1251 = vsel %vm766, %v1235, %v1250
        %v1253 = vunpack.c.l.s4 1934713408
        %v1254 = vunpack.c.0.s8 %v1253
        %v1255 = vperm.slane %v1249, %v1254
        %v1257 = vunpack.c.l.s4 1934713408
        %v1258 = vunpack.c.0.s8 %v1257
        %v1259 = vperm.slane %v1251, %v1258
        %v1260 = vrot.slane %v1255, 4
        %v1261 = vsel %vm766, %v1260, %v1243
        %v1262 = vrot.slane %v1243, 4
        %v1263 = vsel %vm766, %v1255, %v1262
        %v1264 = vrot.slane %v1259, 4
        %v1265 = vsel %vm766, %v1264, %v1247
        %v1266 = vrot.slane %v1247, 4
        %v1267 = vsel %vm766, %v1259, %v1266
        %v1268 = vrot.slane %v1035, 4
        %v1269 = vsel %vm766, %v1268, %v1031
        %v1270 = vrot.slane %v1031, 4
        %v1271 = vsel %vm766, %v1035, %v1270
        %v1273 = vunpack.c.l.s4 1983009808
        %v1274 = vunpack.c.0.s8 %v1273
        %v1275 = vperm.slane %v1269, %v1274
        %v1277 = vunpack.c.l.s4 1983009808
        %v1278 = vunpack.c.0.s8 %v1277
        %v1279 = vperm.slane %v1271, %v1278
        %v1280 = vrot.slane %v1037, 4
        %v1281 = vsel %vm766, %v1280, %v1033
        %v1282 = vrot.slane %v1033, 4
        %v1283 = vsel %vm766, %v1037, %v1282
        %v1285 = vunpack.c.l.s4 1983009808
        %v1286 = vunpack.c.0.s8 %v1285
        %v1287 = vperm.slane %v1281, %v1286
        %v1289 = vunpack.c.l.s4 1983009808
        %v1290 = vunpack.c.0.s8 %v1289
        %v1291 = vperm.slane %v1283, %v1290
        %v1292 = vrot.slane %v1043, 4
        %v1293 = vsel %vm766, %v1292, %v1039
        %v1294 = vrot.slane %v1039, 4
        %v1295 = vsel %vm766, %v1043, %v1294
        %v1297 = vunpack.c.l.s4 1983009808
        %v1298 = vunpack.c.0.s8 %v1297
        %v1299 = vperm.slane %v1293, %v1298
        %v1301 = vunpack.c.l.s4 1983009808
        %v1302 = vunpack.c.0.s8 %v1301
        %v1303 = vperm.slane %v1295, %v1302
        %v1304 = vrot.slane %v1045, 4
        %v1305 = vsel %vm766, %v1304, %v1041
        %v1306 = vrot.slane %v1041, 4
        %v1307 = vsel %vm766, %v1045, %v1306
        %v1309 = vunpack.c.l.s4 1983009808
        %v1310 = vunpack.c.0.s8 %v1309
        %v1311 = vperm.slane %v1305, %v1310
        %v1313 = vunpack.c.l.s4 1983009808
        %v1314 = vunpack.c.0.s8 %v1313
        %v1315 = vperm.slane %v1307, %v1314
        %v1316 = vrot.slane %v1287, 4
        %v1317 = vsel %vm766, %v1316, %v1275
        %v1318 = vrot.slane %v1275, 4
        %v1319 = vsel %vm766, %v1287, %v1318
        %v1321 = vunpack.c.l.s4 1934713408
        %v1322 = vunpack.c.0.s8 %v1321
        %v1323 = vperm.slane %v1317, %v1322
        %v1325 = vunpack.c.l.s4 1934713408
        %v1326 = vunpack.c.0.s8 %v1325
        %v1327 = vperm.slane %v1319, %v1326
        %v1328 = vrot.slane %v1291, 4
        %v1329 = vsel %vm766, %v1328, %v1279
        %v1330 = vrot.slane %v1279, 4
        %v1331 = vsel %vm766, %v1291, %v1330
        %v1333 = vunpack.c.l.s4 1934713408
        %v1334 = vunpack.c.0.s8 %v1333
        %v1335 = vperm.slane %v1329, %v1334
        %v1337 = vunpack.c.l.s4 1934713408
        %v1338 = vunpack.c.0.s8 %v1337
        %v1339 = vperm.slane %v1331, %v1338
        %v1340 = vrot.slane %v1311, 4
        %v1341 = vsel %vm766, %v1340, %v1299
        %v1342 = vrot.slane %v1299, 4
        %v1343 = vsel %vm766, %v1311, %v1342
        %v1345 = vunpack.c.l.s4 1934713408
        %v1346 = vunpack.c.0.s8 %v1345
        %v1347 = vperm.slane %v1341, %v1346
        %v1349 = vunpack.c.l.s4 1934713408
        %v1350 = vunpack.c.0.s8 %v1349
        %v1351 = vperm.slane %v1343, %v1350
        %v1352 = vrot.slane %v1315, 4
        %v1353 = vsel %vm766, %v1352, %v1303
        %v1354 = vrot.slane %v1303, 4
        %v1355 = vsel %vm766, %v1315, %v1354
        %v1357 = vunpack.c.l.s4 1934713408
        %v1358 = vunpack.c.0.s8 %v1357
        %v1359 = vperm.slane %v1353, %v1358
        %v1361 = vunpack.c.l.s4 1934713408
        %v1362 = vunpack.c.0.s8 %v1361
        %v1363 = vperm.slane %v1355, %v1362
        %v1364 = vrot.slane %v1347, 4
        %v1365 = vsel %vm766, %v1364, %v1323
        %v1366 = vrot.slane %v1323, 4
        %v1367 = vsel %vm766, %v1347, %v1366
        %v1368 = vrot.slane %v1351, 4
        %v1369 = vsel %vm766, %v1368, %v1327
        %v1370 = vrot.slane %v1327, 4
        %v1371 = vsel %vm766, %v1351, %v1370
        %v1372 = vrot.slane %v1359, 4
        %v1373 = vsel %vm766, %v1372, %v1335
        %v1374 = vrot.slane %v1335, 4
        %v1375 = vsel %vm766, %v1359, %v1374
        %v1376 = vrot.slane %v1363, 4
        %v1377 = vsel %vm766, %v1376, %v1339
        %v1378 = vrot.slane %v1339, 4
        %v1379 = vsel %vm766, %v1363, %v1378
        %v1380 = vsel %vm766, %v1096, %v1077
        %v1382 = vunpack.c.l.s4 1983009808
        %v1383 = vunpack.c.0.s8 %v1382
        %v1384 = vperm.slane %v1380, %v1383
        %v1385 = vrot.slane %v1097, 4
        %v1386 = vsel %vm766, %v1385, %v1095
        %v1388 = vunpack.c.l.s4 1983009808
        %v1389 = vunpack.c.0.s8 %v1388
        %v1390 = vperm.slane %v1386, %v1389
        %v1391 = vsel %vm766, %v1100, %v1089
        %v1393 = vunpack.c.l.s4 1983009808
        %v1394 = vunpack.c.0.s8 %v1393
        %v1395 = vperm.slane %v1391, %v1394
        %v1396 = vrot.slane %v1101, 4
        %v1397 = vsel %vm766, %v1396, %v1099
        %v1399 = vunpack.c.l.s4 1983009808
        %v1400 = vunpack.c.0.s8 %v1399
        %v1401 = vperm.slane %v1397, %v1400
        %v1402 = vrot.slane %v1390, 4
        %v1403 = vsel %vm766, %v1402, %v1384
        %v1404 = vrot.slane %v1384, 4
        %v1405 = vsel %vm766, %v1390, %v1404
        %v1407 = vunpack.c.l.s4 1934713408
        %v1408 = vunpack.c.0.s8 %v1407
        %v1409 = vperm.slane %v1403, %v1408
        %v1411 = vunpack.c.l.s4 1934713408
        %v1412 = vunpack.c.0.s8 %v1411
        %v1413 = vperm.slane %v1405, %v1412
        %v1414 = vrot.slane %v1401, 4
        %v1415 = vsel %vm766, %v1414, %v1395
        %v1416 = vrot.slane %v1395, 4
        %v1417 = vsel %vm766, %v1401, %v1416
        %v1419 = vunpack.c.l.s4 1934713408
        %v1420 = vunpack.c.0.s8 %v1419
        %v1421 = vperm.slane %v1415, %v1420
        %v1423 = vunpack.c.l.s4 1934713408
        %v1424 = vunpack.c.0.s8 %v1423
        %v1425 = vperm.slane %v1417, %v1424
        %v1426 = vrot.slane %v1421, 4
        %v1427 = vsel %vm766, %v1426, %v1409
        %v1428 = vrot.slane %v1409, 4
        %v1429 = vsel %vm766, %v1421, %v1428
        %v1430 = vrot.slane %v1425, 4
        %v1431 = vsel %vm766, %v1430, %v1413
        %v1432 = vrot.slane %v1413, 4
        %v1433 = vsel %vm766, %v1425, %v1432
        %vm1434 = vcmask 64512
        %1435 = vst.msk [vmem:[#allocation3] sm:$0xff] %vm1434, %v1199
        %1436 = vst.msk [vmem:[#allocation3 + $0x8] sm:$0xff] %vm1434, %v1365
        %1437 = vst.msk [vmem:[#allocation3 + $0x10] sm:$0xff] %vm1434, %v1201
        %1438 = vst.msk [vmem:[#allocation3 + $0x18] sm:$0xff] %vm1434, %v1367
        %1439 = vst.msk [vmem:[#allocation3 + $0x20] sm:$0xff] %vm1434, %v1203
        %1440 = vst.msk [vmem:[#allocation3 + $0x28] sm:$0xff] %vm1434, %v1369
        %1441 = vst.msk [vmem:[#allocation3 + $0x30] sm:$0xff] %vm1434, %v1205
        %1442 = vst.msk [vmem:[#allocation3 + $0x38] sm:$0xff] %vm1434, %v1371
        %1443 = vst.msk [vmem:[#allocation3 + $0x40] sm:$0xff] %vm1434, %v1207
        %1444 = vst.msk [vmem:[#allocation3 + $0x48] sm:$0xff] %vm1434, %v1373
        %1445 = vst.msk [vmem:[#allocation3 + $0x50] sm:$0xff] %vm1434, %v1209
        %1446 = vst.msk [vmem:[#allocation3 + $0x58] sm:$0xff] %vm1434, %v1375
        %1447 = vst.msk [vmem:[#allocation3 + $0x60] sm:$0xff] %vm1434, %v1211
        %1448 = vst.msk [vmem:[#allocation3 + $0x68] sm:$0xff] %vm1434, %v1377
        %1449 = vst.msk [vmem:[#allocation3 + $0x70] sm:$0xff] %vm1434, %v1213
        %1450 = vst.msk [vmem:[#allocation3 + $0x78] sm:$0xff] %vm1434, %v1379
        %1451 = vst.msk [vmem:[#allocation3 + $0x80] sm:$0xff] %vm1434, %v1261
        %1452 = vst.msk [vmem:[#allocation3 + $0x88] sm:$0xff] %vm1434, %v1427
        %1453 = vst.msk [vmem:[#allocation3 + $0x90] sm:$0xff] %vm1434, %v1263
        %1454 = vst.msk [vmem:[#allocation3 + $0x98] sm:$0xff] %vm1434, %v1429
        %1455 = vst.msk [vmem:[#allocation3 + $0xa0] sm:$0xff] %vm1434, %v1265
        %1456 = vst.msk [vmem:[#allocation3 + $0xa8] sm:$0xff] %vm1434, %v1431
        %1457 = vst.msk [vmem:[#allocation3 + $0xb0] sm:$0xff] %vm1434, %v1267
        %1458 = vst.msk [vmem:[#allocation3 + $0xb8] sm:$0xff] %vm1434, %v1433
        %v1459 = vld [vmem:[#allocation3] sm:$0xff]
        %v1460 = vld [vmem:[#allocation3 + $0x8] sm:$0xff]
        %v1461 = vld [vmem:[#allocation3 + $0x10] sm:$0xff]
        %v1462 = vld [vmem:[#allocation3 + $0x18] sm:$0xff]
        %v1463 = vld [vmem:[#allocation3 + $0x20] sm:$0xff]
        %v1464 = vld [vmem:[#allocation3 + $0x28] sm:$0xff]
        %v1465 = vld [vmem:[#allocation3 + $0x30] sm:$0xff]
        %v1466 = vld [vmem:[#allocation3 + $0x38] sm:$0xff]
        %s1467 = scalar_lea.vmem [#allocation3], 64
        %v1468 = vld [vmem:[%s1467] sm:$0xff]
        %v1469 = vld [vmem:[%s1467 + $0x8] sm:$0xff]
        %v1470 = vld [vmem:[%s1467 + $0x10] sm:$0xff]
        %v1471 = vld [vmem:[%s1467 + $0x18] sm:$0xff]
        %v1472 = vld [vmem:[%s1467 + $0x20] sm:$0xff]
        %v1473 = vld [vmem:[%s1467 + $0x28] sm:$0xff]
        %v1474 = vld [vmem:[%s1467 + $0x30] sm:$0xff]
        %v1475 = vld [vmem:[%s1467 + $0x38] sm:$0xff]
        %s1476 = scalar_lea.vmem [#allocation3], 128
        %v1477 = vld [vmem:[%s1476] sm:$0xff]
        %v1478 = vld [vmem:[%s1476 + $0x8] sm:$0xff]
        %v1479 = vld [vmem:[%s1476 + $0x10] sm:$0xff]
        %v1480 = vld [vmem:[%s1476 + $0x18] sm:$0xff]
        %v1481 = vld [vmem:[%s1476 + $0x20] sm:$0xff]
        %v1482 = vld [vmem:[%s1476 + $0x28] sm:$0xff]
        %v1483 = vld [vmem:[%s1476 + $0x30] sm:$0xff]
        %v1484 = vld [vmem:[%s1476 + $0x38] sm:$0xff]
        %v1485 = vpack.c.bf16 %v1459, %v1459
        %v1486 = vpack.c.bf16 %v1460, %v1460
        %v1487 = vpack.c.bf16 %v1461, %v1461
        %v1488 = vpack.c.bf16 %v1462, %v1462
        %v1489 = vpack.c.bf16 %v1463, %v1463
        %v1490 = vpack.c.bf16 %v1464, %v1464
        %v1491 = vpack.c.bf16 %v1465, %v1465
        %v1492 = vpack.c.bf16 %v1466, %v1466
        %v1493 = vpack.c.bf16 %v1468, %v1468
        %v1494 = vpack.c.bf16 %v1469, %v1469
        %v1495 = vpack.c.bf16 %v1470, %v1470
        %v1496 = vpack.c.bf16 %v1471, %v1471
        %v1497 = vpack.c.bf16 %v1472, %v1472
        %v1498 = vpack.c.bf16 %v1473, %v1473
        %v1499 = vpack.c.bf16 %v1474, %v1474
        %v1500 = vpack.c.bf16 %v1475, %v1475
        %v1502 = vsel %vm1434, %v1485, 0
        %v1505 = vsel %vm1434, %v1493, 0
        %1507 = vmatpush.bf16.xpose.msra.mxu0 0
        %1508 = vmatpush.bf16.xpose.msra.mxu0 0
        %1509 = vmatpush.bf16.xpose.msra.mxu0 0
        %1510 = vmatpush.bf16.xpose.msra.mxu0 0
        %1511 = vmatpush.bf16.xpose.msra.mxu0 0
        %1512 = vmatpush.bf16.xpose.msra.mxu0 0
        %1513 = vmatpush.bf16.xpose.msra.mxu0 0
        %1514 = vmatpush.bf16.xpose.msra.mxu0 %v1505
        %1515 = vmatmul.bf16.gmra.mxu0 %v1502
        %v1516 = vpop.f32.mrf.mxu0
        %v1517 = vadd.f32 0.0, %v1516
        %v1518 = vpop.f32.mrf.mxu0
        %1519 = vdwg.mxu0
        %v1521 = vsel %vm1434, %v1486, 0
        %v1524 = vsel %vm1434, %v1494, 0
        %1526 = vmatpush.bf16.xpose.msra.mxu0 0
        %1527 = vmatpush.bf16.xpose.msra.mxu0 0
        %1528 = vmatpush.bf16.xpose.msra.mxu0 0
        %1529 = vmatpush.bf16.xpose.msra.mxu0 0
        %1530 = vmatpush.bf16.xpose.msra.mxu0 0
        %1531 = vmatpush.bf16.xpose.msra.mxu0 0
        %1532 = vmatpush.bf16.xpose.msra.mxu0 0
        %1533 = vmatpush.bf16.xpose.msra.mxu0 %v1524
        %1534 = vmatmul.bf16.gmra.mxu0 %v1521
        %v1535 = vpop.f32.mrf.mxu0
        %v1536 = vadd.f32 0.0, %v1535
        %v1537 = vpop.f32.mrf.mxu0
        %1538 = vdwg.mxu0
        %v1540 = vsel %vm1434, %v1487, 0
        %v1543 = vsel %vm1434, %v1495, 0
        %1545 = vmatpush.bf16.xpose.msra.mxu0 0
        %1546 = vmatpush.bf16.xpose.msra.mxu0 0
        %1547 = vmatpush.bf16.xpose.msra.mxu0 0
        %1548 = vmatpush.bf16.xpose.msra.mxu0 0
        %1549 = vmatpush.bf16.xpose.msra.mxu0 0
        %1550 = vmatpush.bf16.xpose.msra.mxu0 0
        %1551 = vmatpush.bf16.xpose.msra.mxu0 0
        %1552 = vmatpush.bf16.xpose.msra.mxu0 %v1543
        %1553 = vmatmul.bf16.gmra.mxu0 %v1540
        %v1554 = vpop.f32.mrf.mxu0
        %v1555 = vadd.f32 0.0, %v1554
        %v1556 = vpop.f32.mrf.mxu0
        %1557 = vdwg.mxu0
        %v1559 = vsel %vm1434, %v1488, 0
        %v1562 = vsel %vm1434, %v1496, 0
        %1564 = vmatpush.bf16.xpose.msra.mxu0 0
        %1565 = vmatpush.bf16.xpose.msra.mxu0 0
        %1566 = vmatpush.bf16.xpose.msra.mxu0 0
        %1567 = vmatpush.bf16.xpose.msra.mxu0 0
        %1568 = vmatpush.bf16.xpose.msra.mxu0 0
        %1569 = vmatpush.bf16.xpose.msra.mxu0 0
        %1570 = vmatpush.bf16.xpose.msra.mxu0 0
        %1571 = vmatpush.bf16.xpose.msra.mxu0 %v1562
        %1572 = vmatmul.bf16.gmra.mxu0 %v1559
        %v1573 = vpop.f32.mrf.mxu0
        %v1574 = vadd.f32 0.0, %v1573
        %v1575 = vpop.f32.mrf.mxu0
        %1576 = vdwg.mxu0
        %v1578 = vsel %vm1434, %v1489, 0
        %v1581 = vsel %vm1434, %v1497, 0
        %1583 = vmatpush.bf16.xpose.msra.mxu0 0
        %1584 = vmatpush.bf16.xpose.msra.mxu0 0
        %1585 = vmatpush.bf16.xpose.msra.mxu0 0
        %1586 = vmatpush.bf16.xpose.msra.mxu0 0
        %1587 = vmatpush.bf16.xpose.msra.mxu0 0
        %1588 = vmatpush.bf16.xpose.msra.mxu0 0
        %1589 = vmatpush.bf16.xpose.msra.mxu0 0
        %1590 = vmatpush.bf16.xpose.msra.mxu0 %v1581
        %1591 = vmatmul.bf16.gmra.mxu0 %v1578
        %v1592 = vpop.f32.mrf.mxu0
        %v1593 = vadd.f32 0.0, %v1592
        %v1594 = vpop.f32.mrf.mxu0
        %1595 = vdwg.mxu0
        %v1597 = vsel %vm1434, %v1490, 0
        %v1600 = vsel %vm1434, %v1498, 0
        %1602 = vmatpush.bf16.xpose.msra.mxu0 0
        %1603 = vmatpush.bf16.xpose.msra.mxu0 0
        %1604 = vmatpush.bf16.xpose.msra.mxu0 0
        %1605 = vmatpush.bf16.xpose.msra.mxu0 0
        %1606 = vmatpush.bf16.xpose.msra.mxu0 0
        %1607 = vmatpush.bf16.xpose.msra.mxu0 0
        %1608 = vmatpush.bf16.xpose.msra.mxu0 0
        %1609 = vmatpush.bf16.xpose.msra.mxu0 %v1600
        %1610 = vmatmul.bf16.gmra.mxu0 %v1597
        %v1611 = vpop.f32.mrf.mxu0
        %v1612 = vadd.f32 0.0, %v1611
        %v1613 = vpop.f32.mrf.mxu0
        %1614 = vdwg.mxu0
        %v1616 = vsel %vm1434, %v1491, 0
        %v1619 = vsel %vm1434, %v1499, 0
        %1621 = vmatpush.bf16.xpose.msra.mxu0 0
        %1622 = vmatpush.bf16.xpose.msra.mxu0 0
        %1623 = vmatpush.bf16.xpose.msra.mxu0 0
        %1624 = vmatpush.bf16.xpose.msra.mxu0 0
        %1625 = vmatpush.bf16.xpose.msra.mxu0 0
        %1626 = vmatpush.bf16.xpose.msra.mxu0 0
        %1627 = vmatpush.bf16.xpose.msra.mxu0 0
        %1628 = vmatpush.bf16.xpose.msra.mxu0 %v1619
        %1629 = vmatmul.bf16.gmra.mxu0 %v1616
        %v1630 = vpop.f32.mrf.mxu0
        %v1631 = vadd.f32 0.0, %v1630
        %v1632 = vpop.f32.mrf.mxu0
        %1633 = vdwg.mxu0
        %v1635 = vsel %vm1434, %v1492, 0
        %v1638 = vsel %vm1434, %v1500, 0
        %1640 = vmatpush.bf16.xpose.msra.mxu0 0
        %1641 = vmatpush.bf16.xpose.msra.mxu0 0
        %1642 = vmatpush.bf16.xpose.msra.mxu0 0
        %1643 = vmatpush.bf16.xpose.msra.mxu0 0
        %1644 = vmatpush.bf16.xpose.msra.mxu0 0
        %1645 = vmatpush.bf16.xpose.msra.mxu0 0
        %1646 = vmatpush.bf16.xpose.msra.mxu0 0
        %1647 = vmatpush.bf16.xpose.msra.mxu0 %v1638
        %1648 = vmatmul.bf16.gmra.mxu0 %v1635
        %v1649 = vpop.f32.mrf.mxu0
        %v1650 = vadd.f32 0.0, %v1649
        %v1651 = vpop.f32.mrf.mxu0
        %1652 = vdwg.mxu0
        %v1653 = vsel %vm1434, %v1517, -inf
        %1654 = vmax.xlane.f32.xlu0 %v1653
        %v1655 = vpop.xlane.xlu0 %1654
        %v1656 = vsel %vm1434, %v1536, -inf
        %1657 = vmax.xlane.f32.xlu0 %v1656
        %v1658 = vpop.xlane.xlu0 %1657
        %v1659 = vsel %vm1434, %v1555, -inf
        %1660 = vmax.xlane.f32.xlu0 %v1659
        %v1661 = vpop.xlane.xlu0 %1660
        %v1662 = vsel %vm1434, %v1574, -inf
        %1663 = vmax.xlane.f32.xlu0 %v1662
        %v1664 = vpop.xlane.xlu0 %1663
        %v1665 = vsel %vm1434, %v1593, -inf
        %1666 = vmax.xlane.f32.xlu0 %v1665
        %v1667 = vpop.xlane.xlu0 %1666
        %v1668 = vsel %vm1434, %v1612, -inf
        %1669 = vmax.xlane.f32.xlu0 %v1668
        %v1670 = vpop.xlane.xlu0 %1669
        %v1671 = vsel %vm1434, %v1631, -inf
        %1672 = vmax.xlane.f32.xlu0 %v1671
        %v1673 = vpop.xlane.xlu0 %1672
        %v1674 = vsel %vm1434, %v1650, -inf
        %1675 = vmax.xlane.f32.xlu0 %v1674
        %v1676 = vpop.xlane.xlu0 %1675
        %v1677 = vsub.f32 %v1517, %v1655
        %v1678 = vsub.f32 %v1536, %v1658
        %v1679 = vsub.f32 %v1555, %v1661
        %v1680 = vsub.f32 %v1574, %v1664
        %v1681 = vsub.f32 %v1593, %v1667
        %v1682 = vsub.f32 %v1612, %v1670
        %v1683 = vsub.f32 %v1631, %v1673
        %v1684 = vsub.f32 %v1650, %v1676
        %v1685 = vmul.f32 %v1677, 1.442695
        %v1686 = vpow.pop %v1685
        %v1687 = vmul.f32 %v1678, 1.442695
        %v1688 = vpow.pop %v1687
        %v1689 = vmul.f32 %v1679, 1.442695
        %v1690 = vpow.pop %v1689
        %v1691 = vmul.f32 %v1680, 1.442695
        %v1692 = vpow.pop %v1691
        %v1693 = vmul.f32 %v1681, 1.442695
        %v1694 = vpow.pop %v1693
        %v1695 = vmul.f32 %v1682, 1.442695
        %v1696 = vpow.pop %v1695
        %v1697 = vmul.f32 %v1683, 1.442695
        %v1698 = vpow.pop %v1697
        %v1699 = vmul.f32 %v1684, 1.442695
        %v1700 = vpow.pop %v1699
        %v1701 = vsel %vm1434, %v1686, 0.0
        %1702 = vadd.xlane.f32.xlu0 %v1701
        %v1703 = vpop.xlane.xlu0 %1702
        %v1704 = vsel %vm1434, %v1688, 0.0
        %1705 = vadd.xlane.f32.xlu0 %v1704
        %v1706 = vpop.xlane.xlu0 %1705
        %v1707 = vsel %vm1434, %v1690, 0.0
        %1708 = vadd.xlane.f32.xlu0 %v1707
        %v1709 = vpop.xlane.xlu0 %1708
        %v1710 = vsel %vm1434, %v1692, 0.0
        %1711 = vadd.xlane.f32.xlu0 %v1710
        %v1712 = vpop.xlane.xlu0 %1711
        %v1713 = vsel %vm1434, %v1694, 0.0
        %1714 = vadd.xlane.f32.xlu0 %v1713
        %v1715 = vpop.xlane.xlu0 %1714
        %v1716 = vsel %vm1434, %v1696, 0.0
        %1717 = vadd.xlane.f32.xlu0 %v1716
        %v1718 = vpop.xlane.xlu0 %1717
        %v1719 = vsel %vm1434, %v1698, 0.0
        %1720 = vadd.xlane.f32.xlu0 %v1719
        %v1721 = vpop.xlane.xlu0 %1720
        %v1722 = vsel %vm1434, %v1700, 0.0
        %1723 = vadd.xlane.f32.xlu0 %v1722
        %v1724 = vpop.xlane.xlu0 %1723
        %v1725 = vpack.c.bf16 %v1686, %v1686
        %v1726 = vpack.c.bf16 %v1688, %v1688
        %v1727 = vpack.c.bf16 %v1690, %v1690
        %v1728 = vpack.c.bf16 %v1692, %v1692
        %v1729 = vpack.c.bf16 %v1694, %v1694
        %v1730 = vpack.c.bf16 %v1696, %v1696
        %v1731 = vpack.c.bf16 %v1698, %v1698
        %v1732 = vpack.c.bf16 %v1700, %v1700
        %v1733 = vpack.c.bf16 %v1477, %v1477
        %v1734 = vpack.c.bf16 %v1478, %v1478
        %v1735 = vpack.c.bf16 %v1479, %v1479
        %v1736 = vpack.c.bf16 %v1480, %v1480
        %v1737 = vpack.c.bf16 %v1481, %v1481
        %v1738 = vpack.c.bf16 %v1482, %v1482
        %v1739 = vpack.c.bf16 %v1483, %v1483
        %v1740 = vpack.c.bf16 %v1484, %v1484
        %v1742 = vsel %vm1434, %v1725, 0
        %vm1744 = vcmask 1043456
        %v1746 = vsel %vm1744, %v1733, 0
        %1748 = vmatpush.bf16.msra.mxu0 0
        %1749 = vmatpush.bf16.msra.mxu0 0
        %1750 = vmatpush.bf16.msra.mxu0 0
        %1751 = vmatpush.bf16.msra.mxu0 0
        %1752 = vmatpush.bf16.msra.mxu0 0
        %1753 = vmatpush.bf16.msra.mxu0 0
        %1754 = vmatpush.bf16.msra.mxu0 0
        %1755 = vmatpush.bf16.msra.mxu0 %v1746
        %1756 = vmatmul.bf16.gmra.mxu0 %v1742
        %v1757 = vpop.f32.mrf.mxu0
        %v1758 = vadd.f32 0.0, %v1757
        %v1759 = vpop.f32.mrf.mxu0
        %1760 = vdwg.mxu0
        %v1762 = vsel %vm1434, %v1726, 0
        %v1765 = vsel %vm1744, %v1734, 0
        %1767 = vmatpush.bf16.msra.mxu0 0
        %1768 = vmatpush.bf16.msra.mxu0 0
        %1769 = vmatpush.bf16.msra.mxu0 0
        %1770 = vmatpush.bf16.msra.mxu0 0
        %1771 = vmatpush.bf16.msra.mxu0 0
        %1772 = vmatpush.bf16.msra.mxu0 0
        %1773 = vmatpush.bf16.msra.mxu0 0
        %1774 = vmatpush.bf16.msra.mxu0 %v1765
        %1775 = vmatmul.bf16.gmra.mxu0 %v1762
        %v1776 = vpop.f32.mrf.mxu0
        %v1777 = vadd.f32 0.0, %v1776
        %v1778 = vpop.f32.mrf.mxu0
        %1779 = vdwg.mxu0
        %v1781 = vsel %vm1434, %v1727, 0
        %v1784 = vsel %vm1744, %v1735, 0
        %1786 = vmatpush.bf16.msra.mxu0 0
        %1787 = vmatpush.bf16.msra.mxu0 0
        %1788 = vmatpush.bf16.msra.mxu0 0
        %1789 = vmatpush.bf16.msra.mxu0 0
        %1790 = vmatpush.bf16.msra.mxu0 0
        %1791 = vmatpush.bf16.msra.mxu0 0
        %1792 = vmatpush.bf16.msra.mxu0 0
        %1793 = vmatpush.bf16.msra.mxu0 %v1784
        %1794 = vmatmul.bf16.gmra.mxu0 %v1781
        %v1795 = vpop.f32.mrf.mxu0
        %v1796 = vadd.f32 0.0, %v1795
        %v1797 = vpop.f32.mrf.mxu0
        %1798 = vdwg.mxu0
        %v1800 = vsel %vm1434, %v1728, 0
        %v1803 = vsel %vm1744, %v1736, 0
        %1805 = vmatpush.bf16.msra.mxu0 0
        %1806 = vmatpush.bf16.msra.mxu0 0
        %1807 = vmatpush.bf16.msra.mxu0 0
        %1808 = vmatpush.bf16.msra.mxu0 0
        %1809 = vmatpush.bf16.msra.mxu0 0
        %1810 = vmatpush.bf16.msra.mxu0 0
        %1811 = vmatpush.bf16.msra.mxu0 0
        %1812 = vmatpush.bf16.msra.mxu0 %v1803
        %1813 = vmatmul.bf16.gmra.mxu0 %v1800
        %v1814 = vpop.f32.mrf.mxu0
        %v1815 = vadd.f32 0.0, %v1814
        %v1816 = vpop.f32.mrf.mxu0
        %1817 = vdwg.mxu0
        %v1819 = vsel %vm1434, %v1729, 0
        %v1822 = vsel %vm1744, %v1737, 0
        %1824 = vmatpush.bf16.msra.mxu0 0
        %1825 = vmatpush.bf16.msra.mxu0 0
        %1826 = vmatpush.bf16.msra.mxu0 0
        %1827 = vmatpush.bf16.msra.mxu0 0
        %1828 = vmatpush.bf16.msra.mxu0 0
        %1829 = vmatpush.bf16.msra.mxu0 0
        %1830 = vmatpush.bf16.msra.mxu0 0
        %1831 = vmatpush.bf16.msra.mxu0 %v1822
        %1832 = vmatmul.bf16.gmra.mxu0 %v1819
        %v1833 = vpop.f32.mrf.mxu0
        %v1834 = vadd.f32 0.0, %v1833
        %v1835 = vpop.f32.mrf.mxu0
        %1836 = vdwg.mxu0
        %v1838 = vsel %vm1434, %v1730, 0
        %v1841 = vsel %vm1744, %v1738, 0
        %1843 = vmatpush.bf16.msra.mxu0 0
        %1844 = vmatpush.bf16.msra.mxu0 0
        %1845 = vmatpush.bf16.msra.mxu0 0
        %1846 = vmatpush.bf16.msra.mxu0 0
        %1847 = vmatpush.bf16.msra.mxu0 0
        %1848 = vmatpush.bf16.msra.mxu0 0
        %1849 = vmatpush.bf16.msra.mxu0 0
        %1850 = vmatpush.bf16.msra.mxu0 %v1841
        %1851 = vmatmul.bf16.gmra.mxu0 %v1838
        %v1852 = vpop.f32.mrf.mxu0
        %v1853 = vadd.f32 0.0, %v1852
        %v1854 = vpop.f32.mrf.mxu0
        %1855 = vdwg.mxu0
        %v1857 = vsel %vm1434, %v1731, 0
        %v1860 = vsel %vm1744, %v1739, 0
        %1862 = vmatpush.bf16.msra.mxu0 0
        %1863 = vmatpush.bf16.msra.mxu0 0
        %1864 = vmatpush.bf16.msra.mxu0 0
        %1865 = vmatpush.bf16.msra.mxu0 0
        %1866 = vmatpush.bf16.msra.mxu0 0
        %1867 = vmatpush.bf16.msra.mxu0 0
        %1868 = vmatpush.bf16.msra.mxu0 0
        %1869 = vmatpush.bf16.msra.mxu0 %v1860
        %1870 = vmatmul.bf16.gmra.mxu0 %v1857
        %v1871 = vpop.f32.mrf.mxu0
        %v1872 = vadd.f32 0.0, %v1871
        %v1873 = vpop.f32.mrf.mxu0
        %1874 = vdwg.mxu0
        %v1876 = vsel %vm1434, %v1732, 0
        %v1879 = vsel %vm1744, %v1740, 0
        %1881 = vmatpush.bf16.msra.mxu0 0
        %1882 = vmatpush.bf16.msra.mxu0 0
        %1883 = vmatpush.bf16.msra.mxu0 0
        %1884 = vmatpush.bf16.msra.mxu0 0
        %1885 = vmatpush.bf16.msra.mxu0 0
        %1886 = vmatpush.bf16.msra.mxu0 0
        %1887 = vmatpush.bf16.msra.mxu0 0
        %1888 = vmatpush.bf16.msra.mxu0 %v1879
        %1889 = vmatmul.bf16.gmra.mxu0 %v1876
        %v1890 = vpop.f32.mrf.mxu0
        %v1891 = vadd.f32 0.0, %v1890
        %v1892 = vpop.f32.mrf.mxu0
        %1893 = vdwg.mxu0
        %v1894 = vrcp.pop %v1703
        %v1895 = vrcp.pop %v1706
        %v1896 = vrcp.pop %v1709
        %v1897 = vrcp.pop %v1712
        %v1898 = vrcp.pop %v1715
        %v1899 = vrcp.pop %v1718
        %v1900 = vrcp.pop %v1721
        %v1901 = vrcp.pop %v1724
        %v1902 = vmul.f32 %v1758, %v1894
        %v1903 = vmul.f32 %v1777, %v1895
        %v1904 = vmul.f32 %v1796, %v1896
        %v1905 = vmul.f32 %v1815, %v1897
        %v1906 = vmul.f32 %v1834, %v1898
        %v1907 = vmul.f32 %v1853, %v1899
        %v1908 = vmul.f32 %v1872, %v1900
        %v1909 = vmul.f32 %v1891, %v1901
        %1910 = vst.msk [vmem:[#allocation4] sm:$0xff] %vm1434, %v1902
        %1911 = vst.msk [vmem:[#allocation4 + $0x8] sm:$0xff] %vm1434, %v1903
        %1912 = vst.msk [vmem:[#allocation4 + $0x10] sm:$0xff] %vm1434, %v1904
        %1913 = vst.msk [vmem:[#allocation4 + $0x18] sm:$0xff] %vm1434, %v1905
        %1914 = vst.msk [vmem:[#allocation4 + $0x20] sm:$0xff] %vm1434, %v1906
        %1915 = vst.msk [vmem:[#allocation4 + $0x28] sm:$0xff] %vm1434, %v1907
        %1916 = vst.msk [vmem:[#allocation4 + $0x30] sm:$0xff] %vm1434, %v1908
        %1917 = vst.msk [vmem:[#allocation4 + $0x38] sm:$0xff] %vm1434, %v1909
        %v1918 = vld [vmem:[#allocation4] sm:$0xff]
        %v1919 = vld [vmem:[#allocation4 + $0x8] sm:$0xff]
        %v1920 = vld [vmem:[#allocation4 + $0x10] sm:$0xff]
        %v1921 = vld [vmem:[#allocation4 + $0x18] sm:$0xff]
        %v1922 = vld [vmem:[#allocation4 + $0x20] sm:$0xff]
        %v1923 = vld [vmem:[#allocation4 + $0x28] sm:$0xff]
        %v1924 = vld [vmem:[#allocation4 + $0x30] sm:$0xff]
        %v1925 = vld [vmem:[#allocation4 + $0x38] sm:$0xff]
        %v1926 = vrot.slane %v1922, 4
        %v1927 = vsel %vm766, %v1926, %v1918
        %v1928 = vrot.slane %v1918, 4
        %v1929 = vsel %vm766, %v1922, %v1928
        %v1931 = vunpack.c.l.s4 1983009808
        %v1932 = vunpack.c.0.s8 %v1931
        %v1933 = vperm.slane %v1927, %v1932
        %v1935 = vunpack.c.l.s4 1983009808
        %v1936 = vunpack.c.0.s8 %v1935
        %v1937 = vperm.slane %v1929, %v1936
        %v1938 = vrot.slane %v1924, 4
        %v1939 = vsel %vm766, %v1938, %v1920
        %v1940 = vrot.slane %v1920, 4
        %v1941 = vsel %vm766, %v1924, %v1940
        %v1943 = vunpack.c.l.s4 1983009808
        %v1944 = vunpack.c.0.s8 %v1943
        %v1945 = vperm.slane %v1939, %v1944
        %v1947 = vunpack.c.l.s4 1983009808
        %v1948 = vunpack.c.0.s8 %v1947
        %v1949 = vperm.slane %v1941, %v1948
        %v1950 = vrot.slane %v1945, 4
        %v1951 = vsel %vm766, %v1950, %v1933
        %v1952 = vrot.slane %v1933, 4
        %v1953 = vsel %vm766, %v1945, %v1952
        %v1955 = vunpack.c.l.s4 1934713408
        %v1956 = vunpack.c.0.s8 %v1955
        %v1957 = vperm.slane %v1951, %v1956
        %v1959 = vunpack.c.l.s4 1934713408
        %v1960 = vunpack.c.0.s8 %v1959
        %v1961 = vperm.slane %v1953, %v1960
        %v1962 = vrot.slane %v1949, 4
        %v1963 = vsel %vm766, %v1962, %v1937
        %v1964 = vrot.slane %v1937, 4
        %v1965 = vsel %vm766, %v1949, %v1964
        %v1967 = vunpack.c.l.s4 1934713408
        %v1968 = vunpack.c.0.s8 %v1967
        %v1969 = vperm.slane %v1963, %v1968
        %v1971 = vunpack.c.l.s4 1934713408
        %v1972 = vunpack.c.0.s8 %v1971
        %v1973 = vperm.slane %v1965, %v1972
        %v1974 = vrot.slane %v1957, 4
        %v1975 = vsel %vm766, 0.0, %v1974
        %v1976 = vrot.slane %v1961, 4
        %v1977 = vsel %vm766, 0.0, %v1976
        %v1978 = vrot.slane %v1969, 4
        %v1979 = vsel %vm766, 0.0, %v1978
        %v1980 = vrot.slane %v1973, 4
        %v1981 = vsel %vm766, 0.0, %v1980
        %v1982 = vrot.slane %v1923, 4
        %v1983 = vsel %vm766, %v1982, %v1919
        %v1984 = vrot.slane %v1919, 4
        %v1985 = vsel %vm766, %v1923, %v1984
        %v1987 = vunpack.c.l.s4 1983009808
        %v1988 = vunpack.c.0.s8 %v1987
        %v1989 = vperm.slane %v1983, %v1988
        %v1991 = vunpack.c.l.s4 1983009808
        %v1992 = vunpack.c.0.s8 %v1991
        %v1993 = vperm.slane %v1985, %v1992
        %v1994 = vrot.slane %v1925, 4
        %v1995 = vsel %vm766, %v1994, %v1921
        %v1996 = vrot.slane %v1921, 4
        %v1997 = vsel %vm766, %v1925, %v1996
        %v1999 = vunpack.c.l.s4 1983009808
        %v2000 = vunpack.c.0.s8 %v1999
        %v2001 = vperm.slane %v1995, %v2000
        %v2003 = vunpack.c.l.s4 1983009808
        %v2004 = vunpack.c.0.s8 %v2003
        %v2005 = vperm.slane %v1997, %v2004
        %v2006 = vrot.slane %v2001, 4
        %v2007 = vsel %vm766, %v2006, %v1989
        %v2008 = vrot.slane %v1989, 4
        %v2009 = vsel %vm766, %v2001, %v2008
        %v2011 = vunpack.c.l.s4 1934713408
        %v2012 = vunpack.c.0.s8 %v2011
        %v2013 = vperm.slane %v2007, %v2012
        %v2015 = vunpack.c.l.s4 1934713408
        %v2016 = vunpack.c.0.s8 %v2015
        %v2017 = vperm.slane %v2009, %v2016
        %v2018 = vrot.slane %v2005, 4
        %v2019 = vsel %vm766, %v2018, %v1993
        %v2020 = vrot.slane %v1993, 4
        %v2021 = vsel %vm766, %v2005, %v2020
        %v2023 = vunpack.c.l.s4 1934713408
        %v2024 = vunpack.c.0.s8 %v2023
        %v2025 = vperm.slane %v2019, %v2024
        %v2027 = vunpack.c.l.s4 1934713408
        %v2028 = vunpack.c.0.s8 %v2027
        %v2029 = vperm.slane %v2021, %v2028
        %v2030 = vrot.slane %v2013, 4
        %v2031 = vsel %vm766, 0.0, %v2030
        %v2032 = vrot.slane %v2017, 4
        %v2033 = vsel %vm766, 0.0, %v2032
        %v2034 = vrot.slane %v2025, 4
        %v2035 = vsel %vm766, 0.0, %v2034
        %v2036 = vrot.slane %v2029, 4
        %v2037 = vsel %vm766, 0.0, %v2036
        %v2038 = vsel %vm766, %v1976, %v1957
        %v2040 = vunpack.c.l.s4 1983009808
        %v2041 = vunpack.c.0.s8 %v2040
        %v2042 = vperm.slane %v2038, %v2041
        %v2043 = vrot.slane %v1977, 4
        %v2044 = vsel %vm766, %v2043, %v1975
        %v2046 = vunpack.c.l.s4 1983009808
        %v2047 = vunpack.c.0.s8 %v2046
        %v2048 = vperm.slane %v2044, %v2047
        %v2049 = vsel %vm766, %v1980, %v1969
        %v2051 = vunpack.c.l.s4 1983009808
        %v2052 = vunpack.c.0.s8 %v2051
        %v2053 = vperm.slane %v2049, %v2052
        %v2054 = vrot.slane %v1981, 4
        %v2055 = vsel %vm766, %v2054, %v1979
        %v2057 = vunpack.c.l.s4 1983009808
        %v2058 = vunpack.c.0.s8 %v2057
        %v2059 = vperm.slane %v2055, %v2058
        %v2060 = vrot.slane %v2048, 4
        %v2061 = vsel %vm766, %v2060, %v2042
        %v2062 = vrot.slane %v2042, 4
        %v2063 = vsel %vm766, %v2048, %v2062
        %v2065 = vunpack.c.l.s4 1934713408
        %v2066 = vunpack.c.0.s8 %v2065
        %v2067 = vperm.slane %v2061, %v2066
        %v2069 = vunpack.c.l.s4 1934713408
        %v2070 = vunpack.c.0.s8 %v2069
        %v2071 = vperm.slane %v2063, %v2070
        %v2072 = vrot.slane %v2059, 4
        %v2073 = vsel %vm766, %v2072, %v2053
        %v2074 = vrot.slane %v2053, 4
        %v2075 = vsel %vm766, %v2059, %v2074
        %v2077 = vunpack.c.l.s4 1934713408
        %v2078 = vunpack.c.0.s8 %v2077
        %v2079 = vperm.slane %v2073, %v2078
        %v2081 = vunpack.c.l.s4 1934713408
        %v2082 = vunpack.c.0.s8 %v2081
        %v2083 = vperm.slane %v2075, %v2082
        %v2084 = vrot.slane %v2079, 4
        %v2085 = vsel %vm766, %v2084, %v2067
        %v2086 = vrot.slane %v2067, 4
        %v2087 = vsel %vm766, %v2079, %v2086
        %v2088 = vrot.slane %v2083, 4
        %v2089 = vsel %vm766, %v2088, %v2071
        %v2090 = vrot.slane %v2071, 4
        %v2091 = vsel %vm766, %v2083, %v2090
        %v2092 = vsel %vm766, %v2032, %v2013
        %v2094 = vunpack.c.l.s4 1983009808
        %v2095 = vunpack.c.0.s8 %v2094
        %v2096 = vperm.slane %v2092, %v2095
        %v2097 = vrot.slane %v2033, 4
        %v2098 = vsel %vm766, %v2097, %v2031
        %v2100 = vunpack.c.l.s4 1983009808
        %v2101 = vunpack.c.0.s8 %v2100
        %v2102 = vperm.slane %v2098, %v2101
        %v2103 = vsel %vm766, %v2036, %v2025
        %v2105 = vunpack.c.l.s4 1983009808
        %v2106 = vunpack.c.0.s8 %v2105
        %v2107 = vperm.slane %v2103, %v2106
        %v2108 = vrot.slane %v2037, 4
        %v2109 = vsel %vm766, %v2108, %v2035
        %v2111 = vunpack.c.l.s4 1983009808
        %v2112 = vunpack.c.0.s8 %v2111
        %v2113 = vperm.slane %v2109, %v2112
        %v2114 = vrot.slane %v2102, 4
        %v2115 = vsel %vm766, %v2114, %v2096
        %v2116 = vrot.slane %v2096, 4
        %v2117 = vsel %vm766, %v2102, %v2116
        %v2119 = vunpack.c.l.s4 1934713408
        %v2120 = vunpack.c.0.s8 %v2119
        %v2121 = vperm.slane %v2115, %v2120
        %v2123 = vunpack.c.l.s4 1934713408
        %v2124 = vunpack.c.0.s8 %v2123
        %v2125 = vperm.slane %v2117, %v2124
        %v2126 = vrot.slane %v2113, 4
        %v2127 = vsel %vm766, %v2126, %v2107
        %v2128 = vrot.slane %v2107, 4
        %v2129 = vsel %vm766, %v2113, %v2128
        %v2131 = vunpack.c.l.s4 1934713408
        %v2132 = vunpack.c.0.s8 %v2131
        %v2133 = vperm.slane %v2127, %v2132
        %v2135 = vunpack.c.l.s4 1934713408
        %v2136 = vunpack.c.0.s8 %v2135
        %v2137 = vperm.slane %v2129, %v2136
        %v2138 = vrot.slane %v2133, 4
        %v2139 = vsel %vm766, %v2138, %v2121
        %v2140 = vrot.slane %v2121, 4
        %v2141 = vsel %vm766, %v2133, %v2140
        %v2142 = vrot.slane %v2137, 4
        %v2143 = vsel %vm766, %v2142, %v2125
        %v2144 = vrot.slane %v2125, 4
        %v2145 = vsel %vm766, %v2137, %v2144
        %2148 = vrot.lane.b32.xlu0 %v2087, 8
        %v2149 = vpop.permute.xlu0 %2148
        %2150 = vrot.lane.b32.xlu0 %v2141, 8
        %v2151 = vpop.permute.xlu0 %2150
        %2156 = vrot.lane.b32.xlu0 %v2089, 16
        %v2157 = vpop.permute.xlu0 %2156
        %2158 = vrot.lane.b32.xlu0 %v2143, 16
        %v2159 = vpop.permute.xlu0 %2158
        %2164 = vrot.lane.b32.xlu0 %v2091, 24
        %v2165 = vpop.permute.xlu0 %2164
        %2166 = vrot.lane.b32.xlu0 %v2145, 24
        %v2167 = vpop.permute.xlu0 %2166
        %v2170 = vsel %vm1434, %v2085, %v2149
        %v2171 = vsel %vm1434, %v2139, %v2151
        %vm2172 = vcmask 130048
        %v2173 = vsel %vm2172, %v2170, %v2157
        %v2174 = vsel %vm2172, %v2171, %v2159
        %vm2175 = vcmask 195584
        %v2176 = vsel %vm2175, %v2173, %v2165
        %v2177 = vsel %vm2175, %v2174, %v2167
        %v2178 = vpack.c.bf16 %v2177, %v2176
        %v2179 = vld [vmem:[%s613] sm:$0xf]
        %v2180 = vld [vmem:[%s613 + $0x4] sm:$0xf]
        %v2181 = vld [vmem:[%s613 + $0x8] sm:$0xf]
        %v2182 = vld [vmem:[%s613 + $0xc] sm:$0xf]
        %v2183 = vld [vmem:[%s616] sm:$0x1]
        %v2185 = vperm.slane %v2183, 0
        %v2191 = vunpack.c.l.b16 %v2179
        %v2192 = vunpack.c.l.b16 %v2180
        %v2193 = vunpack.c.l.b16 %v2181
        %v2194 = vunpack.c.l.b16 %v2182
        %v2195 = vpack.c.b16 %v2192, %v2191
        %v2196 = vpack.c.b16 %v2194, %v2193
        %v2200 = vsel %vm679, %v2178, 0
        %2202 = vmatpush.bf16.msra.mxu0 0
        %2203 = vmatpush.bf16.msra.mxu0 0
        %2204 = vmatpush.bf16.msra.mxu0 0
        %2205 = vmatpush.bf16.msra.mxu0 0
        %2206 = vmatpush.bf16.msra.mxu0 0
        %2207 = vmatpush.bf16.msra.mxu0 0
        %2208 = vmatpush.bf16.msra.mxu0 %v2196
        %2209 = vmatpush.bf16.msra.mxu0 %v2195
        %2210 = vmatmul.bf16.gmra.mxu0 %v2200
        %v2211 = vpop.f32.mrf.mxu0
        %v2212 = vadd.f32 %v2185, %v2211
        %v2213 = vpop.f32.mrf.mxu0
        %v2214 = vadd.f32 %v2185, %v2213
        %2215 = vdwg.mxu0
        %v2216 = vadd.f32 %v656, %v2212
        %v2217 = vadd.f32 %v657, %v2214
        %v2218 = vadd.f32 %v656, %v2216
        %v2219 = vadd.f32 %v657, %v2217
        %v2220 = vld [vmem:[%s619] sm:$0x1]
        %v2221 = vld [vmem:[%s622] sm:$0x1]
        %v2222 = vsel %vm679, %v2218, 0.0
        %2223 = vadd.xlane.f32.xlu0 %v2222
        %v2224 = vpop.xlane.xlu0 %2223
        %v2225 = vsel %vm679, %v2219, 0.0
        %2226 = vadd.xlane.f32.xlu0 %v2225
        %v2227 = vpop.xlane.xlu0 %2226
        %v2228 = vrcp.pop 32.0
        %v2229 = vmul.f32 32.0, %v2228
        %v2230 = vsub.f32 1.0, %v2229
        %v2231 = vmul.f32 %v2228, %v2230
        %v2232 = vadd.f32 %v2228, %v2231
        %vm2233 = vweird.f32 %v2228
        %v2234 = vsel %vm2233, %v2228, %v2232
        %v2235 = vmul.f32 %v2224, %v2234
        %v2236 = vmul.f32 %v2227, %v2234
        %v2237 = vsub.f32 %v2218, %v2235
        %v2238 = vsub.f32 %v2219, %v2236
        %v2239 = vmul.f32 %v2237, %v2237
        %v2240 = vmul.f32 %v2238, %v2238
        %v2241 = vsel %vm679, %v2239, 0.0
        %2242 = vadd.xlane.f32.xlu0 %v2241
        %v2243 = vpop.xlane.xlu0 %2242
        %v2244 = vsel %vm679, %v2240, 0.0
        %2245 = vadd.xlane.f32.xlu0 %v2244
        %v2246 = vpop.xlane.xlu0 %2245
        %v2247 = vmul.f32 %v2243, %v2234
        %v2248 = vmul.f32 %v2246, %v2234
        %v2249 = vadd.f32 %v2247, 1e-05
        %v2250 = vadd.f32 %v2248, 1e-05
        %v2251 = vrsqrt.pop %v2249
        %v2252 = vmul.f32 %v2251, %v2249
        %v2253 = vmul.f32 %v2252, %v2251
        %v2254 = vmul.f32 0.5, %v2253
        %v2255 = vsub.f32 1.5, %v2254
        %v2256 = vmul.f32 %v2251, %v2255
        %vm2257 = vweird.f32 %v2249
        %vm2258 = vweird.f32 %v2251
        %vm2259 = vmor %vm2257, %vm2258
        %v2260 = vsel %vm2259, %v2251, %v2256
        %v2261 = vrsqrt.pop %v2250
        %v2262 = vmul.f32 %v2261, %v2250
        %v2263 = vmul.f32 %v2262, %v2261
        %v2264 = vmul.f32 0.5, %v2263
        %v2265 = vsub.f32 1.5, %v2264
        %v2266 = vmul.f32 %v2261, %v2265
        %vm2267 = vweird.f32 %v2250
        %vm2268 = vweird.f32 %v2261
        %vm2269 = vmor %vm2267, %vm2268
        %v2270 = vsel %vm2269, %v2261, %v2266
        %v2271 = vmul.f32 %v2237, %v2260
        %v2272 = vmul.f32 %v2238, %v2270
        %v2274 = vperm.slane %v2220, 0
        %v2276 = vmul.f32 %v2271, %v2274
        %v2277 = vmul.f32 %v2272, %v2274
        %v2279 = vperm.slane %v2221, 0
        %v2281 = vadd.f32 %v2276, %v2279
        %v2282 = vadd.f32 %v2277, %v2279
        %v2283 = vpack.c.bf16 %v2282, %v2281
        %v2284 = vld [vmem:[%s633] sm:$0xf]
        %v2285 = vld [vmem:[%s633 + $0x4] sm:$0xf]
        %v2286 = vld [vmem:[%s633 + $0x8] sm:$0xf]
        %v2287 = vld [vmem:[%s633 + $0xc] sm:$0xf]
        %v2288 = vld [vmem:[%s636] sm:$0x1]
        %v2290 = vperm.slane %v2288, 0
        %v2296 = vunpack.c.l.b16 %v2284
        %v2297 = vunpack.c.l.b16 %v2285
        %v2298 = vunpack.c.l.b16 %v2286
        %v2299 = vunpack.c.l.b16 %v2287
        %v2300 = vpack.c.b16 %v2297, %v2296
        %v2301 = vpack.c.b16 %v2299, %v2298
        %v2305 = vsel %vm679, %v2283, 0
        %2307 = vmatpush.bf16.msra.mxu0 0
        %2308 = vmatpush.bf16.msra.mxu0 0
        %2309 = vmatpush.bf16.msra.mxu0 0
        %2310 = vmatpush.bf16.msra.mxu0 0
        %2311 = vmatpush.bf16.msra.mxu0 0
        %2312 = vmatpush.bf16.msra.mxu0 0
        %2313 = vmatpush.bf16.msra.mxu0 %v2301
        %2314 = vmatpush.bf16.msra.mxu0 %v2300
        %2315 = vmatmul.bf16.gmra.mxu0 %v2305
        %v2316 = vpop.f32.mrf.mxu0
        %v2317 = vadd.f32 %v2290, %v2316
        %v2318 = vpop.f32.mrf.mxu0
        %v2319 = vadd.f32 %v2290, %v2318
        %2320 = vdwg.mxu0
        %v2321 = vmax.f32 %v2317, 0.0
        %v2322 = vmax.f32 %v2319, 0.0
        %v2323 = vpack.c.bf16 %v2322, %v2321
        %v2324 = vld [vmem:[%s641] sm:$0xf]
        %v2325 = vld [vmem:[%s641 + $0x4] sm:$0xf]
        %v2326 = vld [vmem:[%s641 + $0x8] sm:$0xf]
        %v2327 = vld [vmem:[%s641 + $0xc] sm:$0xf]
        %v2328 = vld [vmem:[%s641 + $0x10] sm:$0xf]
        %v2329 = vld [vmem:[%s641 + $0x14] sm:$0xf]
        %v2330 = vld [vmem:[%s641 + $0x18] sm:$0xf]
        %v2331 = vld [vmem:[%s641 + $0x1c] sm:$0xf]
        %v2332 = vld [vmem:[%s641 + $0x20] sm:$0xf]
        %v2333 = vld [vmem:[%s641 + $0x24] sm:$0xf]
        %v2334 = vld [vmem:[%s641 + $0x28] sm:$0xf]
        %v2335 = vld [vmem:[%s641 + $0x2c] sm:$0xf]
        %v2336 = vld [vmem:[%s641 + $0x30] sm:$0xf]
        %v2337 = vld [vmem:[%s641 + $0x34] sm:$0xf]
        %v2338 = vld [vmem:[%s641 + $0x38] sm:$0xf]
        %v2339 = vld [vmem:[%s641 + $0x3c] sm:$0xf]
        %v2340 = vld [vmem:[%s644] sm:$0x1]
        %v2342 = vperm.slane %v2340, 0
        %v2360 = vunpack.c.l.b16 %v2324
        %v2361 = vunpack.c.l.b16 %v2325
        %v2362 = vunpack.c.l.b16 %v2326
        %v2363 = vunpack.c.l.b16 %v2327
        %v2364 = vunpack.c.l.b16 %v2328
        %v2365 = vunpack.c.l.b16 %v2329
        %v2366 = vunpack.c.l.b16 %v2330
        %v2367 = vunpack.c.l.b16 %v2331
        %v2368 = vunpack.c.l.b16 %v2332
        %v2369 = vunpack.c.l.b16 %v2333
        %v2370 = vunpack.c.l.b16 %v2334
        %v2371 = vunpack.c.l.b16 %v2335
        %v2372 = vunpack.c.l.b16 %v2336
        %v2373 = vunpack.c.l.b16 %v2337
        %v2374 = vunpack.c.l.b16 %v2338
        %v2375 = vunpack.c.l.b16 %v2339
        %v2376 = vpack.c.b16 %v2361, %v2360
        %v2377 = vpack.c.b16 %v2363, %v2362
        %v2378 = vpack.c.b16 %v2365, %v2364
        %v2379 = vpack.c.b16 %v2367, %v2366
        %v2380 = vpack.c.b16 %v2369, %v2368
        %v2381 = vpack.c.b16 %v2371, %v2370
        %v2382 = vpack.c.b16 %v2373, %v2372
        %v2383 = vpack.c.b16 %v2375, %v2374
        %2392 = vmatpush.bf16.msra.mxu0 %v2383
        %2393 = vmatpush.bf16.msra.mxu0 %v2382
        %2394 = vmatpush.bf16.msra.mxu0 %v2381
        %2395 = vmatpush.bf16.msra.mxu0 %v2380
        %2396 = vmatpush.bf16.msra.mxu0 %v2379
        %2397 = vmatpush.bf16.msra.mxu0 %v2378
        %2398 = vmatpush.bf16.msra.mxu0 %v2377
        %2399 = vmatpush.bf16.msra.mxu0 %v2376
        %2400 = vmatmul.bf16.gmra.mxu0 %v2323
        %v2401 = vpop.f32.mrf.mxu0
        %v2402 = vadd.f32 %v2342, %v2401
        %v2403 = vpop.f32.mrf.mxu0
        %v2404 = vadd.f32 %v2342, %v2403
        %2405 = vdwg.mxu0
        %v2406 = vadd.f32 %v2281, %v2402
        %v2407 = vadd.f32 %v2282, %v2404
        %v2408 = vadd.f32 %v2281, %v2406
        %v2409 = vadd.f32 %v2282, %v2407
        %v2410 = vld [vmem:[%s625] sm:$0x1]
        %v2411 = vld [vmem:[%s628] sm:$0x1]
        %v2412 = vsel %vm679, %v2408, 0.0
        %2413 = vadd.xlane.f32.xlu0 %v2412
        %v2414 = vpop.xlane.xlu0 %2413
        %v2415 = vsel %vm679, %v2409, 0.0
        %2416 = vadd.xlane.f32.xlu0 %v2415
        %v2417 = vpop.xlane.xlu0 %2416
        %v2418 = vmul.f32 %v2414, %v2234
        %v2419 = vmul.f32 %v2417, %v2234
        %v2420 = vsub.f32 %v2408, %v2418
        %v2421 = vsub.f32 %v2409, %v2419
        %v2422 = vmul.f32 %v2420, %v2420
        %v2423 = vmul.f32 %v2421, %v2421
        %v2424 = vsel %vm679, %v2422, 0.0
        %2425 = vadd.xlane.f32.xlu0 %v2424
        %v2426 = vpop.xlane.xlu0 %2425
        %v2427 = vsel %vm679, %v2423, 0.0
        %2428 = vadd.xlane.f32.xlu0 %v2427
        %v2429 = vpop.xlane.xlu0 %2428
        %v2430 = vmul.f32 %v2426, %v2234
        %v2431 = vmul.f32 %v2429, %v2234
        %v2432 = vadd.f32 %v2430, 1e-05
        %v2433 = vadd.f32 %v2431, 1e-05
        %v2434 = vrsqrt.pop %v2432
        %v2435 = vmul.f32 %v2434, %v2432
        %v2436 = vmul.f32 %v2435, %v2434
        %v2437 = vmul.f32 0.5, %v2436
        %v2438 = vsub.f32 1.5, %v2437
        %v2439 = vmul.f32 %v2434, %v2438
        %vm2440 = vweird.f32 %v2432
        %vm2441 = vweird.f32 %v2434
        %vm2442 = vmor %vm2440, %vm2441
        %v2443 = vsel %vm2442, %v2434, %v2439
        %v2444 = vrsqrt.pop %v2433
        %v2445 = vmul.f32 %v2444, %v2433
        %v2446 = vmul.f32 %v2445, %v2444
        %v2447 = vmul.f32 0.5, %v2446
        %v2448 = vsub.f32 1.5, %v2447
        %v2449 = vmul.f32 %v2444, %v2448
        %vm2450 = vweird.f32 %v2433
        %vm2451 = vweird.f32 %v2444
        %vm2452 = vmor %vm2450, %vm2451
        %v2453 = vsel %vm2452, %v2444, %v2449
        %v2454 = vmul.f32 %v2420, %v2443
        %v2455 = vmul.f32 %v2421, %v2453
        %v2457 = vperm.slane %v2410, 0
        %v2459 = vmul.f32 %v2454, %v2457
        %v2460 = vmul.f32 %v2455, %v2457
        %v2462 = vperm.slane %v2411, 0
        %v2464 = vadd.f32 %v2459, %v2462
        %v2465 = vadd.f32 %v2460, %v2462
        %2466 = vst.msk [vmem:[#allocation2] sm:$0xff] %vm679, %v2464
        %2467 = vst.msk [vmem:[#allocation2 + $0x8] sm:$0xff] %vm679, %v2465
        %p2468 = scmp.eq.s32.totalorder %s32, 1
        // Predicated region
        $region77: #{tpu_custom_call.1} parent=71 // pred_check
          %p2469 = pneg %p2468
        $region78: #{tpu_custom_call.1} parent=71 // pred_check_branch
          %2471 = sbr.rel (%p2469) target = $region80
        $region79: #{tpu_custom_call.1} parent=71 // pred_region
          %2472 = vst.msk [vmem:[%s594] sm:$0xff] %vm679, %v2464
          %2473 = vst.msk [vmem:[%s594 + $0x8] sm:$0xff] %vm679, %v2465
        $region80: #{tpu_custom_call.1} parent=71 // pred_fallthru
          _
        %s2474 = sand.u32 %s385, 1
        %s2475 = scalar_lea.sflag [#allocation6], %s2474
        %s2476 = sand.u32 %s385, 1
        %s2477 = smul.addr %s2476, 16
        %s2478 = scalar_lea.vmem [#allocation5], %s2477
        // Predicated region
        $region81: #{tpu_custom_call.1} parent=71 // pred_check
          %p2479 = pneg %p395
        $region82: #{tpu_custom_call.1} parent=71 // pred_check_branch
          %2481 = sbr.rel (%p2479) target = $region84
        $region83: #{tpu_custom_call.1} parent=71 // pred_region
          %s2482 = smul.u32 2, %s31
          %2484 = vsyncadd %s2475, 0
          %s2485 = smul.addr %s2482, 8
          %s2486 = scalar_lea.hbm %s13, %s2485
          %s2487 = sshll.u32 %s2478, 4
          %s2488 = int_to_ptr.vmem [resolvable:$true] %s2487
          %s2489 = sshll.u32 %s2486, 4
          %s2490 = int_to_ptr.hbm [resolvable:$true] %s2489
          %2495 = dma.vmem_to_hbm [thread:$0]  %s2488, 256, %s2490, %s2475, 128, 128, 8
        $region84: #{tpu_custom_call.1} parent=71 // pred_fallthru
          _
      $region72: #{tpu_custom_call.1} parent=5 // pred_fallthru
        _
      %p2496 = scmp.le.s32.totalorder 2, %s22
      // Predicated region
      $region85: #{tpu_custom_call.1} parent=5 // pred_check
        %p2497 = pneg %p2496
      $region86: #{tpu_custom_call.1} parent=5 // pred_check_branch
        %2499 = sbr.rel (%p2497) target = $region88
      $region87: #{tpu_custom_call.1} parent=5 // pred_region
        %s2500 = ssub.s32 %s22, 2
        // Predicated region
        $region89: #{tpu_custom_call.1} parent=87 // pred_check
          %p2501 = pneg %p401
        $region90: #{tpu_custom_call.1} parent=87 // pred_check_branch
          %2503 = sbr.rel (%p2501) target = $region92
        $region91: #{tpu_custom_call.1} parent=87 // pred_region
          %s2504 = sand.u32 %s386, 1
          %s2505 = scalar_lea.sflag [#allocation6], %s2504
          %s2506 = sand.u32 %s386, 1
          %s2507 = smul.addr %s2506, 16
          %s2508 = scalar_lea.vmem [#allocation5], %s2507
          %2510 = dma.done %s2505, 256
        $region92: #{tpu_custom_call.1} parent=87 // pred_fallthru
          _
      $region88: #{tpu_custom_call.1} parent=5 // pred_fallthru
        _
    $region6: #{tpu_custom_call.1} parent=1 // loop_footer
      %s26 = sadd.s32 1, %s22
    $region7: #{tpu_custom_call.1} parent=1 // loop_footer_branch
      %21 = sbr.rel target = $region3
    $region8: #{tpu_custom_call.1} parent=1 // loop_exit
      _
    %2511 = vsyncpa [#allocation6], 1
    %s2512 = scalar_lea.sflag [#allocation6], 1
    %2513 = vsyncpa %s2512, 1

</llo_original>
